<compile_context>
chip_gen: v7x
topology: tpu7x:2x2x1
jax: 0.10.0
libtpu: 0.0.40
codegen_flags: <defaults>
</compile_context>

<pallas_src>
import math

import jax
import jax.numpy as jnp
from jax import lax
from jax.experimental import pallas as pl
from jax.experimental.pallas import tpu as pltpu


_SQRT1_2 = 0.7071067811865476


def _gelu_exact_f32(x):
    # matches torch.nn.GELU() default (erf formulation); x is f32
    return 0.5 * x * (1.0 + lax.erf(x * _SQRT1_2))


def _make_rgblock_kernel(n_chunks, hc, use_tanh_gelu=False):
    """Build the kernel body for a fixed hidden-chunking plan."""

    def act(x):
        if use_tanh_gelu:
            # EUP tanh path (numerics differ slightly from torch's erf GELU).
            return jax.nn.gelu(x, approximate=True)
        return _gelu_exact_f32(x)

    def kernel(x_ref, w1h_ref, w1v_ref, b1h_ref, b1v_ref, w2_ref, b2_ref,
               o_ref, acc_ref):
        # x_ref:   (1, C_in, tL)   one batch element, a slab of positions (L in lanes)
        # w1h/w1v: (H, C_in)       fc1 weight split into gate / value halves
        # b1h/b1v: (H, 1)          f32
        # w2:      (C_out, H)
        # b2:      (C_out, 1)      f32
        # o_ref:   (1, C_out, tL)
        # acc_ref: (C_out, tL)     f32 scratch (used on the chunked path)
        x = x_ref[0]                                 # (C_in, tL), storage dtype

        if n_chunks == 1:
            # Small/medium H: single pass, no slicing.
            h = jnp.dot(w1h_ref[...], x,
                        preferred_element_type=jnp.float32) + b1h_ref[...]
            v = jnp.dot(w1v_ref[...], x,
                        preferred_element_type=jnp.float32) + b1v_ref[...]
            g = act(h) * v
            out = jnp.dot(w2_ref[...], g.astype(w2_ref.dtype),
                          preferred_element_type=jnp.float32) + b2_ref[...]
            o_ref[0] = out.astype(o_ref.dtype)
        else:
            # Large H: chunk the hidden dim, accumulate fc2 into VMEM scratch.
            acc_ref[...] = jnp.zeros_like(acc_ref)

            def body(c, carry):
                r = pl.multiple_of(c * hc, hc)       # hc is a multiple of 128
                h = jnp.dot(w1h_ref[pl.ds(r, hc), :], x,
                            preferred_element_type=jnp.float32) \
                    + b1h_ref[pl.ds(r, hc), :]
                v = jnp.dot(w1v_ref[pl.ds(r, hc), :], x,
                            preferred_element_type=jnp.float32) \
                    + b1v_ref[pl.ds(r, hc), :]
                g = act(h) * v
                acc_ref[...] += jnp.dot(w2_ref[:, pl.ds(r, hc)],
                                        g.astype(w2_ref.dtype),
                                        preferred_element_type=jnp.float32)
                return carry

            lax.fori_loop(0, n_chunks, body, 0, unroll=True)
            o_ref[0] = (acc_ref[...] + b2_ref[...]).astype(o_ref.dtype)

    return kernel


def _tpu_vmem_bytes():
    """Physical per-core VMEM; conservative (v7x) fallback if unqueryable."""
    try:
        info = pltpu.get_tpu_info()
        v = getattr(info, "vmem_capacity_bytes", None)
        if v:
            return int(v)
    except Exception:
        pass
    return 64 << 20


def _pick_hidden_chunk(H):
    """Largest lane/MXU-aligned divisor of H (<=512); H itself if none."""
    if H <= 512:
        return H
    for hc in (512, 256, 128):
        if H % hc == 0:
            return hc
    return H


def rgblock_forward(x_ncl, params, *, tl=None, use_tanh_gelu=False):
    """RGBlock (use_dwconv=False) forward.  x_ncl: (N, C_in, L) -> (N, C_out, L)."""
    w1h, w1v, b1h, b1v, w2, b2 = params
    N, C_in, L = x_ncl.shape
    H = w1h.shape[0]
    C_out = w2.shape[0]

    # Generation-aware caps: 48 MiB on v7x (64 MiB phys), 96 MiB on v5e/v6e (128 MiB).
    vmem_phys = _tpu_vmem_bytes()
    vmem_cap = (vmem_phys * 3) // 4
    if tl is None:
        tl = 1024 if vmem_phys >= (128 << 20) else 512
    assert tl % 128 == 0, "position tile must be lane-aligned"

    # Position tile: full-L block when L is small, else a lane-aligned tile.
    # Ragged last block is handled by Pallas partial load / masked store.
    tl_eff = L if L <= tl else tl

    # Keep >=2 parallel grid points when possible so both v7x TCs get work.
    if N * pl.cdiv(L, tl_eff) < 2 and L >= 256:
        tl_eff = max(128, (((L + 1) // 2 + 127) // 128) * 128)

    # Hidden-dim chunking plan.
    Hc = _pick_hidden_chunk(H)
    n_chunks = H // Hc

    itemsize = jnp.dtype(x_ncl.dtype).itemsize
    w_itemsize = jnp.dtype(w1h.dtype).itemsize
    weight_bytes = (2 * H * C_in + C_out * H) * w_itemsize + (2 * H + C_out) * 4

    def vmem_budget(tl_e):
        act_bytes = (2 * C_in + 2 * C_out) * tl_e * itemsize   # double-buffered x/out slabs
        interm = 4 * Hc * tl_e * 4                             # live f32 h/v/g (+ slack)
        acc_bytes = C_out * tl_e * 4                           # fc2 accumulator scratch
        # weights counted x2 (covers the no-pipeline_mode fallback)
        return act_bytes + interm + acc_bytes + 2 * weight_bytes + (6 << 20)

    # Shrink the position tile if the working set exceeds the cap.
    while vmem_budget(tl_eff) > vmem_cap and tl_eff > 128:
        tl_eff = max(128, (((tl_eff // 2) + 127) // 128) * 128)

    n_l = pl.cdiv(L, tl_eff)
    grid = (N, n_l)
    vmem_limit = int(min(max(vmem_budget(tl_eff), 32 << 20), vmem_cap))

    flops = 2 * N * L * (C_in * 2 * H + H * C_out)
    bytes_accessed = N * (C_in + C_out) * L * itemsize + weight_bytes
    cost = pl.CostEstimate(flops=int(flops), transcendentals=int(N * L * H),
                           bytes_accessed=int(bytes_accessed))

    kernel = _make_rgblock_kernel(n_chunks, Hc, use_tanh_gelu)

    def build_call(single_buffer_weights):
        def w_spec(shape):
            # Grid-invariant operands: single-buffer to reclaim VMEM.
            if single_buffer_weights:
                return pl.BlockSpec(shape, lambda n, l: (0, 0),
                                    pipeline_mode=pl.Buffered(1))
            return pl.BlockSpec(shape, lambda n, l: (0, 0))

        return pl.pallas_call(
            kernel,
            out_shape=jax.ShapeDtypeStruct((N, C_out, L), x_ncl.dtype),
            grid_spec=pltpu.PrefetchScalarGridSpec(
                num_scalar_prefetch=0,
                grid=grid,
                in_specs=[
                    pl.BlockSpec((1, C_in, tl_eff), lambda n, l: (n, 0, l)),
                    w_spec(w1h.shape), w_spec(w1v.shape),
                    w_spec(b1h.shape), w_spec(b1v.shape),
                    w_spec(w2.shape), w_spec(b2.shape),
                ],
                out_specs=pl.BlockSpec((1, C_out, tl_eff), lambda n, l: (n, 0, l)),
                scratch_shapes=[pltpu.VMEM((C_out, tl_eff), jnp.float32)],
            ),
            compiler_params=pltpu.CompilerParams(
                dimension_semantics=("parallel", "parallel"),
                vmem_limit_bytes=vmem_limit),
            cost_estimate=cost,
        )

    args = (x_ncl, w1h, w1v, b1h, b1v, w2, b2)
    if hasattr(pl, "Buffered"):
        try:
            return build_call(True)(*args)
        except Exception:
            # pipeline_mode / Buffered(1) unsupported in this JAX build: fall back.
            pass
    return build_call(False)(*args)


def init_rgblock_params(key, in_features, hidden_features, out_features,
                        dtype=jnp.float32):
    """Deterministic init mirroring Conv1d(kernel_size=1) parameter shapes.

    fc1.weight (2H, C_in, 1) is stored split as w1h (H, C_in), w1v (H, C_in);
    fc1.bias   (2H,)          as b1h (H, 1),   b1v (H, 1)   [f32];
    fc2.weight (C_out, H, 1)  as w2  (C_out, H);
    fc2.bias   (C_out,)       as b2  (C_out, 1)             [f32].
    """
    k1, k2, k3, k4 = jax.random.split(key, 4)
    bound1 = 1.0 / math.sqrt(in_features)
    bound2 = 1.0 / math.sqrt(hidden_features)
    H = hidden_features
    w1 = jax.random.uniform(k1, (2 * H, in_features),
                            minval=-bound1, maxval=bound1, dtype=jnp.float32)
    b1 = jax.random.uniform(k2, (2 * H, 1),
                            minval=-bound1, maxval=bound1, dtype=jnp.float32)
    w2 = jax.random.uniform(k3, (out_features, H),
                            minval=-bound2, maxval=bound2, dtype=jnp.float32)
    b2 = jax.random.uniform(k4, (out_features, 1),
                            minval=-bound2, maxval=bound2, dtype=jnp.float32)
    return (w1[:H].astype(dtype), w1[H:].astype(dtype),
            b1[:H], b1[H:], w2.astype(dtype), b2)


def rgblock_reference(x_ncl, params, *, precision=None):
    """Pure-JAX reference of the same forward (channels-major, f32 math)."""
    w1h, w1v, b1h, b1v, w2, b2 = params
    xf = x_ncl.astype(jnp.float32)
    h = jnp.einsum('hc,ncl->nhl', w1h.astype(jnp.float32), xf,
                   precision=precision) + b1h
    v = jnp.einsum('hc,ncl->nhl', w1v.astype(jnp.float32), xf,
                   precision=precision) + b1v
    g = jax.nn.gelu(h, approximate=False) * v
    out = jnp.einsum('oh,nhl->nol', w2.astype(jnp.float32), g,
                     precision=precision) + b2
    return out.astype(x_ncl.dtype)


if __name__ == "__main__":
    # --- Test 1: small shapes (single hidden chunk, full-L block) -----------
    N, C_in, L = 2, 4, 16
    hidden = 32
    C_out = C_in  # out_features defaults to in_features

    key = jax.random.PRNGKey(0)
    kx, kp = jax.random.split(key)
    x = jax.random.normal(kx, (N, C_in, L), dtype=jnp.float32)
    params = init_rgblock_params(kp, C_in, hidden, C_out)

    out = jax.block_until_ready(rgblock_forward(x, params))
    ref = rgblock_reference(x, params)
    assert out.shape == (N, C_out, L)
    assert jnp.allclose(out, ref, atol=1e-5, rtol=1e-5), "mismatch vs reference (small)"

    # --- Test 2: exercises H-chunked accumulation, the ragged last L block
    # (no jnp.pad), and the >=2-grid-point split heuristic. ------------------
    N2, C2_in, L2, H2, C2_out = 1, 16, 300, 768, 16
    key2 = jax.random.PRNGKey(1)
    kx2, kp2 = jax.random.split(key2)
    x2 = jax.random.normal(kx2, (N2, C2_in, L2), dtype=jnp.float32)
    params2 = init_rgblock_params(kp2, C2_in, H2, C2_out)

    out2 = jax.block_until_ready(rgblock_forward(x2, params2, tl=512))
    ref2 = rgblock_reference(x2, params2, precision=lax.Precision.HIGHEST)
    assert out2.shape == (N2, C2_out, L2)
    assert jnp.allclose(out2, ref2, atol=5e-3, rtol=5e-3), "mismatch vs reference (chunked)"

    print("KERNEL_OK")
</pallas_src>

<mosaic_0001>
module attributes {stable_mosaic.version = 11 : i64} {
  func.func @kernel(%arg0: i32, %arg1: i32, %arg2: memref<1x4x16xf32, #tpu.memory_space<vmem>>, %arg3: memref<32x4xf32, #tpu.memory_space<vmem>>, %arg4: memref<32x4xf32, #tpu.memory_space<vmem>>, %arg5: memref<32x1xf32, #tpu.memory_space<vmem>>, %arg6: memref<32x1xf32, #tpu.memory_space<vmem>>, %arg7: memref<4x32xf32, #tpu.memory_space<vmem>>, %arg8: memref<4x1xf32, #tpu.memory_space<vmem>>, %arg9: memref<1x4x16xf32, #tpu.memory_space<vmem>>, %arg10: memref<4x16xf32, #tpu.memory_space<vmem>>) attributes {dimension_semantics = [#tpu.dimension_semantics<parallel>, #tpu.dimension_semantics<parallel>], iteration_bounds = array<i64: 2, 1>, scalar_prefetch = 0 : i64, scratch_operands = 1 : i64, tpu.core_type = #tpu.core_type<tc>, window_params = [{transform_indices = @transform_0, window_bounds = array<i64: 1, 4, 16>}, {pipeline_mode = #tpu.pipeline_mode<synchronous>, transform_indices = @transform_1, window_bounds = array<i64: 32, 4>}, {pipeline_mode = #tpu.pipeline_mode<synchronous>, transform_indices = @transform_2, window_bounds = array<i64: 32, 4>}, {pipeline_mode = #tpu.pipeline_mode<synchronous>, transform_indices = @transform_3, window_bounds = array<i64: 32, 1>}, {pipeline_mode = #tpu.pipeline_mode<synchronous>, transform_indices = @transform_4, window_bounds = array<i64: 32, 1>}, {pipeline_mode = #tpu.pipeline_mode<synchronous>, transform_indices = @transform_5, window_bounds = array<i64: 4, 32>}, {pipeline_mode = #tpu.pipeline_mode<synchronous>, transform_indices = @transform_6, window_bounds = array<i64: 4, 1>}, {transform_indices = @transform_7, window_bounds = array<i64: 1, 4, 16>}]} {
    %c0 = arith.constant 0 : index
    %c0_0 = arith.constant 0 : index
    %c0_1 = arith.constant 0 : index
    %0 = vector.load %arg2[%c0, %c0_0, %c0_1] : memref<1x4x16xf32, #tpu.memory_space<vmem>>, vector<1x4x16xf32>
    %1 = vector.shape_cast %0 : vector<1x4x16xf32> to vector<4x16xf32>
    %c0_2 = arith.constant 0 : index
    %c0_3 = arith.constant 0 : index
    %2 = vector.load %arg3[%c0_2, %c0_3] : memref<32x4xf32, #tpu.memory_space<vmem>>, vector<32x4xf32>
    %cst = arith.constant dense<0.000000e+00> : vector<32x16xf32>
    %3 = tpu.matmul %2, %1, %cst {dimension_numbers = #tpu.dot_dimension_numbers<[1], [0], [0], [1], [0, 0, 1, 1], [], []>} : vector<32x4xf32>, vector<4x16xf32>, vector<32x16xf32> -> vector<32x16xf32>
    %c0_4 = arith.constant 0 : index
    %c0_5 = arith.constant 0 : index
    %4 = vector.load %arg5[%c0_4, %c0_5] : memref<32x1xf32, #tpu.memory_space<vmem>>, vector<32x1xf32>
    %5 = vector.broadcast %4 : vector<32x1xf32> to vector<32x16xf32>
    %6 = arith.addf %3, %5 : vector<32x16xf32>
    %c0_6 = arith.constant 0 : index
    %c0_7 = arith.constant 0 : index
    %7 = vector.load %arg4[%c0_6, %c0_7] : memref<32x4xf32, #tpu.memory_space<vmem>>, vector<32x4xf32>
    %cst_8 = arith.constant dense<0.000000e+00> : vector<32x16xf32>
    %8 = tpu.matmul %7, %1, %cst_8 {dimension_numbers = #tpu.dot_dimension_numbers<[1], [0], [0], [1], [0, 0, 1, 1], [], []>} : vector<32x4xf32>, vector<4x16xf32>, vector<32x16xf32> -> vector<32x16xf32>
    %c0_9 = arith.constant 0 : index
    %c0_10 = arith.constant 0 : index
    %9 = vector.load %arg6[%c0_9, %c0_10] : memref<32x1xf32, #tpu.memory_space<vmem>>, vector<32x1xf32>
    %10 = vector.broadcast %9 : vector<32x1xf32> to vector<32x16xf32>
    %11 = arith.addf %8, %10 : vector<32x16xf32>
    %cst_11 = arith.constant 5.000000e-01 : f32
    %12 = vector.broadcast %cst_11 : f32 to vector<32x16xf32>
    %13 = arith.mulf %12, %6 : vector<32x16xf32>
    %cst_12 = arith.constant 0.707106769 : f32
    %14 = vector.broadcast %cst_12 : f32 to vector<32x16xf32>
    %15 = arith.mulf %6, %14 : vector<32x16xf32>
    %16 = math.erf %15 : vector<32x16xf32>
    %cst_13 = arith.constant 1.000000e+00 : f32
    %17 = vector.broadcast %cst_13 : f32 to vector<32x16xf32>
    %18 = arith.addf %17, %16 : vector<32x16xf32>
    %19 = arith.mulf %13, %18 : vector<32x16xf32>
    %20 = arith.mulf %19, %11 : vector<32x16xf32>
    %c0_14 = arith.constant 0 : index
    %c0_15 = arith.constant 0 : index
    %21 = vector.load %arg7[%c0_14, %c0_15] : memref<4x32xf32, #tpu.memory_space<vmem>>, vector<4x32xf32>
    %cst_16 = arith.constant dense<0.000000e+00> : vector<4x16xf32>
    %22 = tpu.matmul %21, %20, %cst_16 {dimension_numbers = #tpu.dot_dimension_numbers<[1], [0], [0], [1], [0, 0, 1, 1], [], []>} : vector<4x32xf32>, vector<32x16xf32>, vector<4x16xf32> -> vector<4x16xf32>
    %c0_17 = arith.constant 0 : index
    %c0_18 = arith.constant 0 : index
    %23 = vector.load %arg8[%c0_17, %c0_18] : memref<4x1xf32, #tpu.memory_space<vmem>>, vector<4x1xf32>
    %24 = vector.broadcast %23 : vector<4x1xf32> to vector<4x16xf32>
    %25 = arith.addf %22, %24 : vector<4x16xf32>
    %c0_19 = arith.constant 0 : index
    %c0_20 = arith.constant 0 : index
    %c0_21 = arith.constant 0 : index
    %26 = vector.load %arg9[%c0_19, %c0_20, %c0_21] : memref<1x4x16xf32, #tpu.memory_space<vmem>>, vector<1x4x16xf32>
    %27 = vector.shape_cast %26 : vector<1x4x16xf32> to vector<4x16xf32>
    %28 = vector.shape_cast %25 : vector<4x16xf32> to vector<1x4x16xf32>
    tpu.vector_store %arg9[%c0_19, %c0_20, %c0_21], %28 {strides = array<i32>} : memref<1x4x16xf32, #tpu.memory_space<vmem>>, vector<1x4x16xf32>,
    return
  }
  func.func @transform_0(%arg0: i32, %arg1: i32) -> (i32, i32, i32) {
    %c0_i32 = arith.constant 0 : i32
    %c0_i32_0 = arith.constant 0 : i32
    return %arg0, %c0_i32, %arg1 : i32, i32, i32
  }
  func.func @transform_1(%arg0: i32, %arg1: i32) -> (i32, i32) {
    %c0_i32 = arith.constant 0 : i32
    %c0_i32_0 = arith.constant 0 : i32
    %c0_i32_1 = arith.constant 0 : i32
    return %c0_i32, %c0_i32_0 : i32, i32
  }
  func.func @transform_2(%arg0: i32, %arg1: i32) -> (i32, i32) {
    %c0_i32 = arith.constant 0 : i32
    %c0_i32_0 = arith.constant 0 : i32
    %c0_i32_1 = arith.constant 0 : i32
    return %c0_i32, %c0_i32_0 : i32, i32
  }
  func.func @transform_3(%arg0: i32, %arg1: i32) -> (i32, i32) {
    %c0_i32 = arith.constant 0 : i32
    %c0_i32_0 = arith.constant 0 : i32
    %c0_i32_1 = arith.constant 0 : i32
    return %c0_i32, %c0_i32_0 : i32, i32
  }
  func.func @transform_4(%arg0: i32, %arg1: i32) -> (i32, i32) {
    %c0_i32 = arith.constant 0 : i32
    %c0_i32_0 = arith.constant 0 : i32
    %c0_i32_1 = arith.constant 0 : i32
    return %c0_i32, %c0_i32_0 : i32, i32
  }
  func.func @transform_5(%arg0: i32, %arg1: i32) -> (i32, i32) {
    %c0_i32 = arith.constant 0 : i32
    %c0_i32_0 = arith.constant 0 : i32
    %c0_i32_1 = arith.constant 0 : i32
    return %c0_i32, %c0_i32_0 : i32, i32
  }
  func.func @transform_6(%arg0: i32, %arg1: i32) -> (i32, i32) {
    %c0_i32 = arith.constant 0 : i32
    %c0_i32_0 = arith.constant 0 : i32
    %c0_i32_1 = arith.constant 0 : i32
    return %c0_i32, %c0_i32_0 : i32, i32
  }
  func.func @transform_7(%arg0: i32, %arg1: i32) -> (i32, i32, i32) {
    %c0_i32 = arith.constant 0 : i32
    %c0_i32_0 = arith.constant 0 : i32
    return %arg0, %c0_i32, %arg1 : i32, i32, i32
  }
}

module attributes {stable_mosaic.version = 11 : i64} {
  func.func @kernel(%arg0: i32, %arg1: i32, %arg2: memref<1x4x16xf32, #tpu.memory_space<vmem>>, %arg3: memref<32x4xf32, #tpu.memory_space<vmem>>, %arg4: memref<32x4xf32, #tpu.memory_space<vmem>>, %arg5: memref<32x1xf32, #tpu.memory_space<vmem>>, %arg6: memref<32x1xf32, #tpu.memory_space<vmem>>, %arg7: memref<4x32xf32, #tpu.memory_space<vmem>>, %arg8: memref<4x1xf32, #tpu.memory_space<vmem>>, %arg9: memref<1x4x16xf32, #tpu.memory_space<vmem>>, %arg10: memref<4x16xf32, #tpu.memory_space<vmem>>) attributes {dimension_semantics = [#tpu.dimension_semantics<parallel>, #tpu.dimension_semantics<parallel>], iteration_bounds = array<i64: 2, 1>, scalar_prefetch = 0 : i64, scratch_operands = 1 : i64, tpu.core_type = #tpu.core_type<tc>, window_params = [{transform_indices = @transform_0, window_bounds = array<i64: 1, 4, 16>}, {pipeline_mode = #tpu.pipeline_mode<synchronous>, transform_indices = @transform_1, window_bounds = array<i64: 32, 4>}, {pipeline_mode = #tpu.pipeline_mode<synchronous>, transform_indices = @transform_2, window_bounds = array<i64: 32, 4>}, {pipeline_mode = #tpu.pipeline_mode<synchronous>, transform_indices = @transform_3, window_bounds = array<i64: 32, 1>}, {pipeline_mode = #tpu.pipeline_mode<synchronous>, transform_indices = @transform_4, window_bounds = array<i64: 32, 1>}, {pipeline_mode = #tpu.pipeline_mode<synchronous>, transform_indices = @transform_5, window_bounds = array<i64: 4, 32>}, {pipeline_mode = #tpu.pipeline_mode<synchronous>, transform_indices = @transform_6, window_bounds = array<i64: 4, 1>}, {transform_indices = @transform_7, window_bounds = array<i64: 1, 4, 16>}]} {
    %c0 = arith.constant 0 : index
    %c0_0 = arith.constant 0 : index
    %c0_1 = arith.constant 0 : index
    %0 = vector.load %arg2[%c0, %c0_0, %c0_1] : memref<1x4x16xf32, #tpu.memory_space<vmem>>, vector<1x4x16xf32>
    %1 = vector.shape_cast %0 : vector<1x4x16xf32> to vector<4x16xf32>
    %c0_2 = arith.constant 0 : index
    %c0_3 = arith.constant 0 : index
    %2 = vector.load %arg3[%c0_2, %c0_3] : memref<32x4xf32, #tpu.memory_space<vmem>>, vector<32x4xf32>
    %cst = arith.constant dense<0.000000e+00> : vector<32x16xf32>
    %3 = tpu.matmul %2, %1, %cst {dimension_numbers = #tpu.dot_dimension_numbers<[1], [0], [0], [1], [0, 0, 1, 1], [], []>} : vector<32x4xf32>, vector<4x16xf32>, vector<32x16xf32> -> vector<32x16xf32>
    %c0_4 = arith.constant 0 : index
    %c0_5 = arith.constant 0 : index
    %4 = vector.load %arg5[%c0_4, %c0_5] : memref<32x1xf32, #tpu.memory_space<vmem>>, vector<32x1xf32>
    %5 = vector.broadcast %4 : vector<32x1xf32> to vector<32x16xf32>
    %6 = arith.addf %3, %5 : vector<32x16xf32>
    %c0_6 = arith.constant 0 : index
    %c0_7 = arith.constant 0 : index
    %7 = vector.load %arg4[%c0_6, %c0_7] : memref<32x4xf32, #tpu.memory_space<vmem>>, vector<32x4xf32>
    %cst_8 = arith.constant dense<0.000000e+00> : vector<32x16xf32>
    %8 = tpu.matmul %7, %1, %cst_8 {dimension_numbers = #tpu.dot_dimension_numbers<[1], [0], [0], [1], [0, 0, 1, 1], [], []>} : vector<32x4xf32>, vector<4x16xf32>, vector<32x16xf32> -> vector<32x16xf32>
    %c0_9 = arith.constant 0 : index
    %c0_10 = arith.constant 0 : index
    %9 = vector.load %arg6[%c0_9, %c0_10] : memref<32x1xf32, #tpu.memory_space<vmem>>, vector<32x1xf32>
    %10 = vector.broadcast %9 : vector<32x1xf32> to vector<32x16xf32>
    %11 = arith.addf %8, %10 : vector<32x16xf32>
    %cst_11 = arith.constant 5.000000e-01 : f32
    %12 = vector.broadcast %cst_11 : f32 to vector<32x16xf32>
    %13 = arith.mulf %12, %6 : vector<32x16xf32>
    %cst_12 = arith.constant 0.707106769 : f32
    %14 = vector.broadcast %cst_12 : f32 to vector<32x16xf32>
    %15 = arith.mulf %6, %14 : vector<32x16xf32>
    %16 = math.erf %15 : vector<32x16xf32>
    %cst_13 = arith.constant 1.000000e+00 : f32
    %17 = vector.broadcast %cst_13 : f32 to vector<32x16xf32>
    %18 = arith.addf %17, %16 : vector<32x16xf32>
    %19 = arith.mulf %13, %18 : vector<32x16xf32>
    %20 = arith.mulf %19, %11 : vector<32x16xf32>
    %c0_14 = arith.constant 0 : index
    %c0_15 = arith.constant 0 : index
    %21 = vector.load %arg7[%c0_14, %c0_15] : memref<4x32xf32, #tpu.memory_space<vmem>>, vector<4x32xf32>
    %cst_16 = arith.constant dense<0.000000e+00> : vector<4x16xf32>
    %22 = tpu.matmul %21, %20, %cst_16 {dimension_numbers = #tpu.dot_dimension_numbers<[1], [0], [0], [1], [0, 0, 1, 1], [], []>} : vector<4x32xf32>, vector<32x16xf32>, vector<4x16xf32> -> vector<4x16xf32>
    %c0_17 = arith.constant 0 : index
    %c0_18 = arith.constant 0 : index
    %23 = vector.load %arg8[%c0_17, %c0_18] : memref<4x1xf32, #tpu.memory_space<vmem>>, vector<4x1xf32>
    %24 = vector.broadcast %23 : vector<4x1xf32> to vector<4x16xf32>
    %25 = arith.addf %22, %24 : vector<4x16xf32>
    %c0_19 = arith.constant 0 : index
    %c0_20 = arith.constant 0 : index
    %c0_21 = arith.constant 0 : index
    %26 = vector.load %arg9[%c0_19, %c0_20, %c0_21] : memref<1x4x16xf32, #tpu.memory_space<vmem>>, vector<1x4x16xf32>
    %27 = vector.shape_cast %26 : vector<1x4x16xf32> to vector<4x16xf32>
    %28 = vector.shape_cast %25 : vector<4x16xf32> to vector<1x4x16xf32>
    tpu.vector_store %arg9[%c0_19, %c0_20, %c0_21], %28 {strides = array<i32>} : memref<1x4x16xf32, #tpu.memory_space<vmem>>, vector<1x4x16xf32>,
    return
  }
  func.func @transform_0(%arg0: i32, %arg1: i32) -> (i32, i32, i32) {
    %c0_i32 = arith.constant 0 : i32
    %c0_i32_0 = arith.constant 0 : i32
    return %arg0, %c0_i32, %arg1 : i32, i32, i32
  }
  func.func @transform_1(%arg0: i32, %arg1: i32) -> (i32, i32) {
    %c0_i32 = arith.constant 0 : i32
    %c0_i32_0 = arith.constant 0 : i32
    %c0_i32_1 = arith.constant 0 : i32
    return %c0_i32, %c0_i32_0 : i32, i32
  }
  func.func @transform_2(%arg0: i32, %arg1: i32) -> (i32, i32) {
    %c0_i32 = arith.constant 0 : i32
    %c0_i32_0 = arith.constant 0 : i32
    %c0_i32_1 = arith.constant 0 : i32
    return %c0_i32, %c0_i32_0 : i32, i32
  }
  func.func @transform_3(%arg0: i32, %arg1: i32) -> (i32, i32) {
    %c0_i32 = arith.constant 0 : i32
    %c0_i32_0 = arith.constant 0 : i32
    %c0_i32_1 = arith.constant 0 : i32
    return %c0_i32, %c0_i32_0 : i32, i32
  }
  func.func @transform_4(%arg0: i32, %arg1: i32) -> (i32, i32) {
    %c0_i32 = arith.constant 0 : i32
    %c0_i32_0 = arith.constant 0 : i32
    %c0_i32_1 = arith.constant 0 : i32
    return %c0_i32, %c0_i32_0 : i32, i32
  }
  func.func @transform_5(%arg0: i32, %arg1: i32) -> (i32, i32) {
    %c0_i32 = arith.constant 0 : i32
    %c0_i32_0 = arith.constant 0 : i32
    %c0_i32_1 = arith.constant 0 : i32
    return %c0_i32, %c0_i32_0 : i32, i32
  }
  func.func @transform_6(%arg0: i32, %arg1: i32) -> (i32, i32) {
    %c0_i32 = arith.constant 0 : i32
    %c0_i32_0 = arith.constant 0 : i32
    %c0_i32_1 = arith.constant 0 : i32
    return %c0_i32, %c0_i32_0 : i32, i32
  }
  func.func @transform_7(%arg0: i32, %arg1: i32) -> (i32, i32, i32) {
    %c0_i32 = arith.constant 0 : i32
    %c0_i32_0 = arith.constant 0 : i32
    return %arg0, %c0_i32, %arg1 : i32, i32, i32
  }
}

</mosaic_0001>

<llo_original>
// kernel: tpu_custom_call.1
$region0: #{tpu_custom_call.1}
  #allocation0 [shape = 'u32[]', space=smem, size = 0x4, offset = 0x4, fixed_abs, tag = 'smem constant byte address 0x4 - core index']
  #allocation1 [shape = 'u32[144,128]{1,0:T(1,128)}', space=vmem, size = 0x12000, scoped, tag = 'internal scratch']
  #allocation2 [shape = 'f32[4,16]{1,0:T(4,128)}', space=vmem, size = 0x800, scoped, tag = 'scratch operand']
  %s0 = inlined_call_operand.vmem [shape: f32[2,4,16], index: 0, kind: input, shape index: {}]
  %s1 = inlined_call_operand.vmem [shape: f32[32,4], index: 1, kind: input, shape index: {}]
  %s2 = inlined_call_operand.vmem [shape: f32[32,4], index: 2, kind: input, shape index: {}]
  %s3 = inlined_call_operand.vmem [shape: f32[32,1], index: 3, kind: input, shape index: {}]
  %s4 = inlined_call_operand.vmem [shape: f32[32,1], index: 4, kind: input, shape index: {}]
  %s5 = inlined_call_operand.vmem [shape: f32[4,32], index: 5, kind: input, shape index: {}]
  %s6 = inlined_call_operand.vmem [shape: f32[4,1], index: 6, kind: input, shape index: {}]
  %s7 = inlined_call_operand.hbm [shape: f32[2,4,16], index: 7, kind: output, shape index: {}]
  %s8 = sld [smem:[#allocation0]]
  $region61: #{tpu_custom_call.1} parent=0
    _
  %s10 = ssub.s32 1, %s8
  %s11 = scalar_select 0, %s10, %s8
  $region1: #{tpu_custom_call.1} parent=0
    #allocation3 [shape = 'u8[4096]{0}', space=vmem, size = 0x1000, scoped, tag = 'output window, operand 0']
    #allocation4 [shape = 's32[2]{0}', space=sflag, size = 0x8, scoped, tag = 'scoped memory for tpu_custom_call.1']
    %12 = vsyncpa [#allocation4], 0
    %s13 = scalar_lea.sflag [#allocation4], 1
    %14 = vsyncpa %s13, 0
    loop: start=0, step=1, limit=4
    $region2: #{tpu_custom_call.1} parent=1 // loop_pre_header
      _
    $region3: #{tpu_custom_call.1} parent=1 // loop_header
      %s16 = sphi 0, %s20
      %p17 = scmp.ge.s32.totalorder %s16, 4
      %s23 = sphi 0, %s35
      %s24 = sphi 0, %s31
      %s25 = sphi 0, %s23
      %s26 = sphi 0, %s24
      %s27 = sphi 0, %s25
      %s28 = sphi 0, %s26
      %s40 = sphi 0, %s42
      %s43 = sphi 0, %s40
      %s44 = sphi 0, %s43
      %s60 = sphi 0, %s44
      %s64 = sphi 0, %s64
      %s66 = sphi 0, %s64
      %s67 = sphi 0, %s66
      %s81 = sphi 0, %s67
      %s85 = sphi 0, %s85
      %s87 = sphi 0, %s85
      %s88 = sphi 0, %s87
      %s102 = sphi 0, %s88
      %s106 = sphi 0, %s106
      %s108 = sphi 0, %s106
      %s109 = sphi 0, %s108
      %s123 = sphi 0, %s109
      %s127 = sphi 0, %s127
      %s129 = sphi 0, %s127
      %s130 = sphi 0, %s129
      %s144 = sphi 0, %s130
      %s148 = sphi 0, %s148
      %s150 = sphi 0, %s148
      %s151 = sphi 0, %s150
      %s165 = sphi 0, %s151
      %s169 = sphi 0, %s169
      %s171 = sphi 0, %s169
      %s172 = sphi 0, %s171
      %s186 = sphi 0, %s172
      %s194 = sphi 0, %s196
      %s197 = sphi 0, %s194
      %s198 = sphi 0, %s197
      %s214 = sphi 0, %s198
    $region4: #{tpu_custom_call.1} parent=1 // loop_header_branch
      %19 = sbr.rel (%p17) target = $region8
    $region5: #{tpu_custom_call.1} parent=1 // loop_body
      %s21 = ssub.s32 %s16, 1
      %s22 = ssub.s32 %s16, 2
      %s29 = sadd.s32 1, %s24
      %p30 = scmp.ge.s32.totalorder %s29, 1
      %s31 = scalar_select %p30, 0, %s29
      %s32 = sadd.s32 1, %s23
      %s33 = scalar_select %p30, %s32, %s23
      %p34 = scmp.ge.s32.totalorder %s33, 2
      %s35 = scalar_select %p34, 0, %s33
      %s36 = ssub.s32 %s23, %s35
      %s37 = ssub.s32 %s24, %s31
      %s38 = sor.u32 %s36, %s37
      %p39 = scmp.eq.s32.totalorder %s38, 0
      %s41 = sadd.s32 %s40, 1
      %s42 = scalar_select %p39, %s40, %s41
      %p45 = pneg %p39
      %p46 = scmp.eq.s32.totalorder %s16, 1
      %p47 = por %p45, %p46
      %p48 = scmp.ne.s32.totalorder %s40, %s43
      %p49 = scmp.eq.s32.totalorder %s16, 0
      %p50 = por %p48, %p49
      %p51 = scmp.ne.s32.totalorder %s40, %s43
      %p52 = scmp.eq.s32.totalorder %s21, 1
      %p53 = por %p51, %p52
      %p54 = scmp.ne.s32.totalorder %s43, %s44
      %p55 = scmp.eq.s32.totalorder %s21, 0
      %p56 = por %p54, %p55
      %p57 = scmp.ne.s32.totalorder %s43, %s44
      %p58 = scmp.eq.s32.totalorder %s22, 1
      %p59 = por %p57, %p58
      %p61 = scmp.ne.s32.totalorder %s44, %s60
      %p62 = scmp.eq.s32.totalorder %s22, 0
      %p63 = por %p61, %p62
      %s65 = sadd.s32 %s64, 1
      %p68 = scmp.eq.s32.totalorder %s16, 1
      %p69 = scmp.ne.s32.totalorder %s64, %s66
      %p70 = scmp.eq.s32.totalorder %s16, 0
      %p71 = por %p69, %p70
      %p72 = scmp.ne.s32.totalorder %s64, %s66
      %p73 = scmp.eq.s32.totalorder %s21, 1
      %p74 = por %p72, %p73
      %p75 = scmp.ne.s32.totalorder %s66, %s67
      %p76 = scmp.eq.s32.totalorder %s21, 0
      %p77 = por %p75, %p76
      %p78 = scmp.ne.s32.totalorder %s66, %s67
      %p79 = scmp.eq.s32.totalorder %s22, 1
      %p80 = por %p78, %p79
      %p82 = scmp.ne.s32.totalorder %s67, %s81
      %p83 = scmp.eq.s32.totalorder %s22, 0
      %p84 = por %p82, %p83
      %s86 = sadd.s32 %s85, 1
      %p89 = scmp.eq.s32.totalorder %s16, 1
      %p90 = scmp.ne.s32.totalorder %s85, %s87
      %p91 = scmp.eq.s32.totalorder %s16, 0
      %p92 = por %p90, %p91
      %p93 = scmp.ne.s32.totalorder %s85, %s87
      %p94 = scmp.eq.s32.totalorder %s21, 1
      %p95 = por %p93, %p94
      %p96 = scmp.ne.s32.totalorder %s87, %s88
      %p97 = scmp.eq.s32.totalorder %s21, 0
      %p98 = por %p96, %p97
      %p99 = scmp.ne.s32.totalorder %s87, %s88
      %p100 = scmp.eq.s32.totalorder %s22, 1
      %p101 = por %p99, %p100
      %p103 = scmp.ne.s32.totalorder %s88, %s102
      %p104 = scmp.eq.s32.totalorder %s22, 0
      %p105 = por %p103, %p104
      %s107 = sadd.s32 %s106, 1
      %p110 = scmp.eq.s32.totalorder %s16, 1
      %p111 = scmp.ne.s32.totalorder %s106, %s108
      %p112 = scmp.eq.s32.totalorder %s16, 0
      %p113 = por %p111, %p112
      %p114 = scmp.ne.s32.totalorder %s106, %s108
      %p115 = scmp.eq.s32.totalorder %s21, 1
      %p116 = por %p114, %p115
      %p117 = scmp.ne.s32.totalorder %s108, %s109
      %p118 = scmp.eq.s32.totalorder %s21, 0
      %p119 = por %p117, %p118
      %p120 = scmp.ne.s32.totalorder %s108, %s109
      %p121 = scmp.eq.s32.totalorder %s22, 1
      %p122 = por %p120, %p121
      %p124 = scmp.ne.s32.totalorder %s109, %s123
      %p125 = scmp.eq.s32.totalorder %s22, 0
      %p126 = por %p124, %p125
      %s128 = sadd.s32 %s127, 1
      %p131 = scmp.eq.s32.totalorder %s16, 1
      %p132 = scmp.ne.s32.totalorder %s127, %s129
      %p133 = scmp.eq.s32.totalorder %s16, 0
      %p134 = por %p132, %p133
      %p135 = scmp.ne.s32.totalorder %s127, %s129
      %p136 = scmp.eq.s32.totalorder %s21, 1
      %p137 = por %p135, %p136
      %p138 = scmp.ne.s32.totalorder %s129, %s130
      %p139 = scmp.eq.s32.totalorder %s21, 0
      %p140 = por %p138, %p139
      %p141 = scmp.ne.s32.totalorder %s129, %s130
      %p142 = scmp.eq.s32.totalorder %s22, 1
      %p143 = por %p141, %p142
      %p145 = scmp.ne.s32.totalorder %s130, %s144
      %p146 = scmp.eq.s32.totalorder %s22, 0
      %p147 = por %p145, %p146
      %s149 = sadd.s32 %s148, 1
      %p152 = scmp.eq.s32.totalorder %s16, 1
      %p153 = scmp.ne.s32.totalorder %s148, %s150
      %p154 = scmp.eq.s32.totalorder %s16, 0
      %p155 = por %p153, %p154
      %p156 = scmp.ne.s32.totalorder %s148, %s150
      %p157 = scmp.eq.s32.totalorder %s21, 1
      %p158 = por %p156, %p157
      %p159 = scmp.ne.s32.totalorder %s150, %s151
      %p160 = scmp.eq.s32.totalorder %s21, 0
      %p161 = por %p159, %p160
      %p162 = scmp.ne.s32.totalorder %s150, %s151
      %p163 = scmp.eq.s32.totalorder %s22, 1
      %p164 = por %p162, %p163
      %p166 = scmp.ne.s32.totalorder %s151, %s165
      %p167 = scmp.eq.s32.totalorder %s22, 0
      %p168 = por %p166, %p167
      %s170 = sadd.s32 %s169, 1
      %p173 = scmp.eq.s32.totalorder %s16, 1
      %p174 = scmp.ne.s32.totalorder %s169, %s171
      %p175 = scmp.eq.s32.totalorder %s16, 0
      %p176 = por %p174, %p175
      %p177 = scmp.ne.s32.totalorder %s169, %s171
      %p178 = scmp.eq.s32.totalorder %s21, 1
      %p179 = por %p177, %p178
      %p180 = scmp.ne.s32.totalorder %s171, %s172
      %p181 = scmp.eq.s32.totalorder %s21, 0
      %p182 = por %p180, %p181
      %p183 = scmp.ne.s32.totalorder %s171, %s172
      %p184 = scmp.eq.s32.totalorder %s22, 1
      %p185 = por %p183, %p184
      %p187 = scmp.ne.s32.totalorder %s172, %s186
      %p188 = scmp.eq.s32.totalorder %s22, 0
      %p189 = por %p187, %p188
      %s190 = ssub.s32 %s23, %s35
      %s191 = ssub.s32 %s24, %s31
      %s192 = sor.u32 %s190, %s191
      %p193 = scmp.eq.s32.totalorder %s192, 0
      %s195 = sadd.s32 %s194, 1
      %s196 = scalar_select %p193, %s194, %s195
      %p199 = pneg %p193
      %p200 = scmp.eq.s32.totalorder %s16, 1
      %p201 = por %p199, %p200
      %p202 = scmp.ne.s32.totalorder %s194, %s197
      %p203 = scmp.eq.s32.totalorder %s16, 0
      %p204 = por %p202, %p203
      %p205 = scmp.ne.s32.totalorder %s194, %s197
      %p206 = scmp.eq.s32.totalorder %s21, 1
      %p207 = por %p205, %p206
      %p208 = scmp.ne.s32.totalorder %s197, %s198
      %p209 = scmp.eq.s32.totalorder %s21, 0
      %p210 = por %p208, %p209
      %p211 = scmp.ne.s32.totalorder %s197, %s198
      %p212 = scmp.eq.s32.totalorder %s22, 1
      %p213 = por %p211, %p212
      %p215 = scmp.ne.s32.totalorder %s198, %s214
      %p216 = scmp.eq.s32.totalorder %s22, 0
      %p217 = por %p215, %p216
      %p218 = scmp.le.s32.totalorder 1, %s16
      %p219 = scmp.lt.s32.totalorder %s16, 3
      %p220 = pnand %p218, %p219
      %p221 = pneg %p220
      // Predicated region
      $region9: #{tpu_custom_call.1} parent=5 // pred_check
        _
      $region10: #{tpu_custom_call.1} parent=5 // pred_check_branch
        %223 = sbr.rel (%p220) target = $region12
      $region11: #{tpu_custom_call.1} parent=5 // pred_region
        %s224 = ssub.s32 %s16, 1
        // Predicated region
        $region13: #{tpu_custom_call.1} parent=11 // pred_check
          %p225 = pneg %p77
        $region14: #{tpu_custom_call.1} parent=11 // pred_check_branch
          %227 = sbr.rel (%p225) target = $region16
        $region15: #{tpu_custom_call.1} parent=11 // pred_region
          _
        $region16: #{tpu_custom_call.1} parent=11 // pred_fallthru
          _
        // Predicated region
        $region17: #{tpu_custom_call.1} parent=11 // pred_check
          %p228 = pneg %p98
        $region18: #{tpu_custom_call.1} parent=11 // pred_check_branch
          %230 = sbr.rel (%p228) target = $region20
        $region19: #{tpu_custom_call.1} parent=11 // pred_region
          _
        $region20: #{tpu_custom_call.1} parent=11 // pred_fallthru
          _
        // Predicated region
        $region21: #{tpu_custom_call.1} parent=11 // pred_check
          %p231 = pneg %p119
        $region22: #{tpu_custom_call.1} parent=11 // pred_check_branch
          %233 = sbr.rel (%p231) target = $region24
        $region23: #{tpu_custom_call.1} parent=11 // pred_region
          _
        $region24: #{tpu_custom_call.1} parent=11 // pred_fallthru
          _
        // Predicated region
        $region25: #{tpu_custom_call.1} parent=11 // pred_check
          %p234 = pneg %p140
        $region26: #{tpu_custom_call.1} parent=11 // pred_check_branch
          %236 = sbr.rel (%p234) target = $region28
        $region27: #{tpu_custom_call.1} parent=11 // pred_region
          _
        $region28: #{tpu_custom_call.1} parent=11 // pred_fallthru
          _
        // Predicated region
        $region29: #{tpu_custom_call.1} parent=11 // pred_check
          %p237 = pneg %p161
        $region30: #{tpu_custom_call.1} parent=11 // pred_check_branch
          %239 = sbr.rel (%p237) target = $region32
        $region31: #{tpu_custom_call.1} parent=11 // pred_region
          _
        $region32: #{tpu_custom_call.1} parent=11 // pred_fallthru
          _
        // Predicated region
        $region33: #{tpu_custom_call.1} parent=11 // pred_check
          %p240 = pneg %p182
        $region34: #{tpu_custom_call.1} parent=11 // pred_check_branch
          %242 = sbr.rel (%p240) target = $region36
        $region35: #{tpu_custom_call.1} parent=11 // pred_region
          _
        $region36: #{tpu_custom_call.1} parent=11 // pred_fallthru
          _
      $region12: #{tpu_custom_call.1} parent=5 // pred_fallthru
        _
      %p243 = scmp.lt.s32.totalorder %s16, 2
      // Predicated region
      $region37: #{tpu_custom_call.1} parent=5 // pred_check
        %p244 = pneg %p243
      $region38: #{tpu_custom_call.1} parent=5 // pred_check_branch
        %246 = sbr.rel (%p244) target = $region40
      $region39: #{tpu_custom_call.1} parent=5 // pred_region
        // Predicated region
        $region41: #{tpu_custom_call.1} parent=39 // pred_check
          %p247 = pneg %p50
        $region42: #{tpu_custom_call.1} parent=39 // pred_check_branch
          %249 = sbr.rel (%p247) target = $region44
        $region43: #{tpu_custom_call.1} parent=39 // pred_region
          %p250 = scmp.lt.s32.totalorder %s23, 1
          %s251 = scalar_select %p250, %s23, 1
          %p252 = scmp.lt.s32.totalorder %s24, 0
          %s253 = scalar_select %p252, %s24, 0
          %s254 = sadd.s32 %s253, %s251
          %s255 = smul.addr %s254, 4
          %s256 = scalar_lea.vmem %s0, %s255
        $region44: #{tpu_custom_call.1} parent=39 // pred_fallthru
          _
      $region40: #{tpu_custom_call.1} parent=5 // pred_fallthru
        _
      %p257 = scmp.le.s32.totalorder 1, %s16
      %p258 = scmp.lt.s32.totalorder %s16, 3
      %p259 = pnand %p257, %p258
      %p260 = pneg %p259
      // Predicated region
      $region45: #{tpu_custom_call.1} parent=5 // pred_check
        _
      $region46: #{tpu_custom_call.1} parent=5 // pred_check_branch
        %262 = sbr.rel (%p259) target = $region48
      $region47: #{tpu_custom_call.1} parent=5 // pred_region
        %s263 = ssub.s32 %s16, 1
        %p264 = scmp.lt.s32.totalorder %s25, 1
        %s265 = scalar_select %p264, %s25, 1
        %p266 = scmp.lt.s32.totalorder %s26, 0
        %s267 = scalar_select %p266, %s26, 0
        %s268 = sadd.s32 %s267, %s265
        %s269 = smul.addr %s268, 4
        %s270 = scalar_lea.vmem %s0, %s269
        %p271 = pneg %p56
        %p272 = pneg %p53
        %p273 = pneg %p77
        %p274 = pneg %p74
        %p275 = pneg %p98
        %p276 = pneg %p95
        %p277 = pneg %p119
        %p278 = pneg %p116
        %p279 = pneg %p140
        %p280 = pneg %p137
        %p281 = pneg %p161
        %p282 = pneg %p158
        %p283 = pneg %p182
        %p284 = pneg %p179
        %p285 = pneg %p210
        %p286 = pneg %p207
        %s287 = sand.u32 %s197, 1
        %s288 = scalar_lea.sflag [#allocation4], %s287
        %s289 = sand.u32 %s197, 1
        %s290 = smul.addr %s289, 4
        %s291 = scalar_lea.vmem [#allocation3], %s290
        %p292 = scmp.lt.s32.totalorder %s25, 1
        %s293 = scalar_select %p292, %s25, 1
        %p294 = scmp.lt.s32.totalorder %s26, 0
        %s295 = scalar_select %p294, %s26, 0
        %s296 = sadd.s32 %s295, %s293
        %s297 = smul.addr %s296, 4
        %s298 = scalar_lea.vmem %s0, %s297
        %v299 = vld [vmem:[%s298] sm:$0xf]
        %v300 = vld [vmem:[%s1] sm:$0xff]
        %v301 = vld [vmem:[%s1 + $0x8] sm:$0xff]
        %v302 = vld [vmem:[%s1 + $0x10] sm:$0xff]
        %v303 = vld [vmem:[%s1 + $0x18] sm:$0xff]
        %v304 = vld [vmem:[%s3] sm:$0xff]
        %v305 = vld [vmem:[%s3 + $0x8] sm:$0xff]
        %v306 = vld [vmem:[%s3 + $0x10] sm:$0xff]
        %v307 = vld [vmem:[%s3 + $0x18] sm:$0xff]
        %309 = vset.pattern.permute.xlu0 0
        %310 = vperm.xlu0 %309, %v304
        %v311 = vpop.permute.xlu0 %310
        %314 = vset.pattern.permute.xlu0 0
        %315 = vperm.xlu0 %314, %v305
        %v316 = vpop.permute.xlu0 %315
        %319 = vset.pattern.permute.xlu0 0
        %320 = vperm.xlu0 %319, %v306
        %v321 = vpop.permute.xlu0 %320
        %324 = vset.pattern.permute.xlu0 0
        %325 = vperm.xlu0 %324, %v307
        %v326 = vpop.permute.xlu0 %325
        %vm328 = vcmask 31744
        %v330 = vsel %vm328, %v300, 0
        %v333 = vsel %vm328, %v301, 0
        %v336 = vsel %vm328, %v302, 0
        %v339 = vsel %vm328, %v303, 0
        %vm341 = vcmask 1043456
        %v343 = vsel %vm341, %v299, 0
        %345 = vmatprep.subr.mxu0 0.0
        %346 = vmatpush1.msra.mxu0 %v343
        %347 = vmatprep.subr.mxu0 0.0
        %348 = vmatpush1.msra.mxu0 0.0
        %349 = vmatprep.subr.mxu0 0.0
        %350 = vmatpush1.msra.mxu0 0.0
        %351 = vmatprep.subr.mxu0 0.0
        %352 = vmatpush1.msra.mxu0 0.0
        %353 = vmatprep.subr.mxu0 0.0
        %354 = vmatpush1.msra.mxu0 0.0
        %355 = vmatprep.subr.mxu0 0.0
        %356 = vmatpush1.msra.mxu0 0.0
        %357 = vmatprep.subr.mxu0 0.0
        %358 = vmatpush1.msra.mxu0 0.0
        %359 = vmatprep.subr.mxu0 0.0
        %360 = vmatpush1.msra.mxu0 0.0
        %361 = vmatprep.subr.mxu0 0.0
        %362 = vmatpush1.msra.mxu0 0.0
        %363 = vmatprep.subr.mxu0 0.0
        %364 = vmatpush1.msra.mxu0 0.0
        %365 = vmatprep.subr.mxu0 0.0
        %366 = vmatpush1.msra.mxu0 0.0
        %367 = vmatprep.subr.mxu0 0.0
        %368 = vmatpush1.msra.mxu0 0.0
        %369 = vmatprep.subr.mxu0 0.0
        %370 = vmatpush1.msra.mxu0 0.0
        %371 = vmatprep.subr.mxu0 0.0
        %372 = vmatpush1.msra.mxu0 0.0
        %373 = vmatprep.subr.mxu0 0.0
        %374 = vmatpush1.msra.mxu0 0.0
        %375 = vmatprep.subr.mxu0 0.0
        %376 = vmatpush1.msra.mxu0 0.0
        %377 = vmatprep.subr.mxu0 0.0
        %378 = vmatpush1.msra.mxu0 0.0
        %379 = vmatprep.subr.mxu0 0.0
        %380 = vmatpush1.msra.mxu0 0.0
        %381 = vmatprep.subr.mxu0 0.0
        %382 = vmatpush1.msra.mxu0 0.0
        %383 = vmatprep.subr.mxu0 0.0
        %384 = vmatpush1.msra.mxu0 0.0
        %385 = vmatprep.subr.mxu0 0.0
        %386 = vmatpush1.msra.mxu0 0.0
        %387 = vmatprep.subr.mxu0 0.0
        %388 = vmatpush1.msra.mxu0 0.0
        %389 = vmatprep.subr.mxu0 0.0
        %390 = vmatpush1.msra.mxu0 0.0
        %391 = vmatprep.subr.mxu0 0.0
        %392 = vmatpush1.msra.mxu0 0.0
        %393 = vmatprep.subr.mxu0 0.0
        %394 = vmatpush1.msra.mxu0 0.0
        %395 = vmatprep.subr.mxu0 0.0
        %396 = vmatpush1.msra.mxu0 0.0
        %397 = vmatprep.subr.mxu0 0.0
        %398 = vmatpush1.msra.mxu0 0.0
        %399 = vmatprep.subr.mxu0 0.0
        %400 = vmatpush1.msra.mxu0 0.0
        %401 = vmatprep.subr.mxu0 0.0
        %402 = vmatpush1.msra.mxu0 0.0
        %403 = vmatprep.subr.mxu0 0.0
        %404 = vmatpush1.msra.mxu0 0.0
        %405 = vmatprep.subr.mxu0 0.0
        %406 = vmatpush1.msra.mxu0 0.0
        %407 = vmatprep.subr.mxu0 0.0
        %408 = vmatpush1.msra.mxu0 0.0
        %409 = vmatprep.mubr.f32.mxu0 0.0
        %410 = vmatmul.mubr.f32.gmra.mrb[0].mxu0 %v330
        %v411 = vpop.f32.mrb[0].mxu0
        %v412 = vadd.f32 %v311, %v411
        %v413 = vpop.f32.mrb[0].mxu0
        %414 = vmatprep.mubr.f32.mxu0 0.0
        %415 = vmatmul.mubr.f32.gmra.mrb[0].mxu0 %v333
        %v416 = vpop.f32.mrb[0].mxu0
        %v417 = vadd.f32 %v316, %v416
        %v418 = vpop.f32.mrb[0].mxu0
        %419 = vmatprep.mubr.f32.mxu0 0.0
        %420 = vmatmul.mubr.f32.gmra.mrb[0].mxu0 %v336
        %v421 = vpop.f32.mrb[0].mxu0
        %v422 = vadd.f32 %v321, %v421
        %v423 = vpop.f32.mrb[0].mxu0
        %424 = vmatprep.mubr.f32.mxu0 0.0
        %425 = vmatmul.mubr.f32.gmra.mrb[0].mxu0 %v339
        %v426 = vpop.f32.mrb[0].mxu0
        %v427 = vadd.f32 %v326, %v426
        %v428 = vpop.f32.mrb[0].mxu0
        %429 = vdwg.mxu0
        %v430 = vld [vmem:[%s2] sm:$0xff]
        %v431 = vld [vmem:[%s2 + $0x8] sm:$0xff]
        %v432 = vld [vmem:[%s2 + $0x10] sm:$0xff]
        %v433 = vld [vmem:[%s2 + $0x18] sm:$0xff]
        %v434 = vld [vmem:[%s4] sm:$0xff]
        %v435 = vld [vmem:[%s4 + $0x8] sm:$0xff]
        %v436 = vld [vmem:[%s4 + $0x10] sm:$0xff]
        %v437 = vld [vmem:[%s4 + $0x18] sm:$0xff]
        %439 = vset.pattern.permute.xlu0 0
        %440 = vperm.xlu0 %439, %v434
        %v441 = vpop.permute.xlu0 %440
        %444 = vset.pattern.permute.xlu0 0
        %445 = vperm.xlu0 %444, %v435
        %v446 = vpop.permute.xlu0 %445
        %449 = vset.pattern.permute.xlu0 0
        %450 = vperm.xlu0 %449, %v436
        %v451 = vpop.permute.xlu0 %450
        %454 = vset.pattern.permute.xlu0 0
        %455 = vperm.xlu0 %454, %v437
        %v456 = vpop.permute.xlu0 %455
        %v459 = vsel %vm328, %v430, 0
        %v462 = vsel %vm328, %v431, 0
        %v465 = vsel %vm328, %v432, 0
        %v468 = vsel %vm328, %v433, 0
        %470 = vmatprep.subr.mxu0 0.0
        %471 = vmatpush1.msra.mxu0 %v343
        %472 = vmatprep.subr.mxu0 0.0
        %473 = vmatpush1.msra.mxu0 0.0
        %474 = vmatprep.subr.mxu0 0.0
        %475 = vmatpush1.msra.mxu0 0.0
        %476 = vmatprep.subr.mxu0 0.0
        %477 = vmatpush1.msra.mxu0 0.0
        %478 = vmatprep.subr.mxu0 0.0
        %479 = vmatpush1.msra.mxu0 0.0
        %480 = vmatprep.subr.mxu0 0.0
        %481 = vmatpush1.msra.mxu0 0.0
        %482 = vmatprep.subr.mxu0 0.0
        %483 = vmatpush1.msra.mxu0 0.0
        %484 = vmatprep.subr.mxu0 0.0
        %485 = vmatpush1.msra.mxu0 0.0
        %486 = vmatprep.subr.mxu0 0.0
        %487 = vmatpush1.msra.mxu0 0.0
        %488 = vmatprep.subr.mxu0 0.0
        %489 = vmatpush1.msra.mxu0 0.0
        %490 = vmatprep.subr.mxu0 0.0
        %491 = vmatpush1.msra.mxu0 0.0
        %492 = vmatprep.subr.mxu0 0.0
        %493 = vmatpush1.msra.mxu0 0.0
        %494 = vmatprep.subr.mxu0 0.0
        %495 = vmatpush1.msra.mxu0 0.0
        %496 = vmatprep.subr.mxu0 0.0
        %497 = vmatpush1.msra.mxu0 0.0
        %498 = vmatprep.subr.mxu0 0.0
        %499 = vmatpush1.msra.mxu0 0.0
        %500 = vmatprep.subr.mxu0 0.0
        %501 = vmatpush1.msra.mxu0 0.0
        %502 = vmatprep.subr.mxu0 0.0
        %503 = vmatpush1.msra.mxu0 0.0
        %504 = vmatprep.subr.mxu0 0.0
        %505 = vmatpush1.msra.mxu0 0.0
        %506 = vmatprep.subr.mxu0 0.0
        %507 = vmatpush1.msra.mxu0 0.0
        %508 = vmatprep.subr.mxu0 0.0
        %509 = vmatpush1.msra.mxu0 0.0
        %510 = vmatprep.subr.mxu0 0.0
        %511 = vmatpush1.msra.mxu0 0.0
        %512 = vmatprep.subr.mxu0 0.0
        %513 = vmatpush1.msra.mxu0 0.0
        %514 = vmatprep.subr.mxu0 0.0
        %515 = vmatpush1.msra.mxu0 0.0
        %516 = vmatprep.subr.mxu0 0.0
        %517 = vmatpush1.msra.mxu0 0.0
        %518 = vmatprep.subr.mxu0 0.0
        %519 = vmatpush1.msra.mxu0 0.0
        %520 = vmatprep.subr.mxu0 0.0
        %521 = vmatpush1.msra.mxu0 0.0
        %522 = vmatprep.subr.mxu0 0.0
        %523 = vmatpush1.msra.mxu0 0.0
        %524 = vmatprep.subr.mxu0 0.0
        %525 = vmatpush1.msra.mxu0 0.0
        %526 = vmatprep.subr.mxu0 0.0
        %527 = vmatpush1.msra.mxu0 0.0
        %528 = vmatprep.subr.mxu0 0.0
        %529 = vmatpush1.msra.mxu0 0.0
        %530 = vmatprep.subr.mxu0 0.0
        %531 = vmatpush1.msra.mxu0 0.0
        %532 = vmatprep.subr.mxu0 0.0
        %533 = vmatpush1.msra.mxu0 0.0
        %534 = vmatprep.mubr.f32.mxu0 0.0
        %535 = vmatmul.mubr.f32.gmra.mrb[0].mxu0 %v459
        %v536 = vpop.f32.mrb[0].mxu0
        %v537 = vadd.f32 %v441, %v536
        %v538 = vpop.f32.mrb[0].mxu0
        %539 = vmatprep.mubr.f32.mxu0 0.0
        %540 = vmatmul.mubr.f32.gmra.mrb[0].mxu0 %v462
        %v541 = vpop.f32.mrb[0].mxu0
        %v542 = vadd.f32 %v446, %v541
        %v543 = vpop.f32.mrb[0].mxu0
        %544 = vmatprep.mubr.f32.mxu0 0.0
        %545 = vmatmul.mubr.f32.gmra.mrb[0].mxu0 %v465
        %v546 = vpop.f32.mrb[0].mxu0
        %v547 = vadd.f32 %v451, %v546
        %v548 = vpop.f32.mrb[0].mxu0
        %549 = vmatprep.mubr.f32.mxu0 0.0
        %550 = vmatmul.mubr.f32.gmra.mrb[0].mxu0 %v468
        %v551 = vpop.f32.mrb[0].mxu0
        %v552 = vadd.f32 %v456, %v551
        %v553 = vpop.f32.mrb[0].mxu0
        %554 = vdwg.mxu0
        %v555 = vmul.f32 %v412, 0.5
        %v556 = vmul.f32 %v417, 0.5
        %v557 = vmul.f32 %v422, 0.5
        %v558 = vmul.f32 %v427, 0.5
        %v559 = vmul.f32 %v412, 0.70710677
        %v560 = vmul.f32 %v417, 0.70710677
        %v561 = vmul.f32 %v422, 0.70710677
        %v562 = vmul.f32 %v427, 0.70710677
        %v563 = verf.f32.pop %v559
        %v564 = verf.f32.pop %v560
        %v565 = verf.f32.pop %v561
        %v566 = verf.f32.pop %v562
        %v567 = vadd.f32 %v563, 1.0
        %v568 = vadd.f32 %v564, 1.0
        %v569 = vadd.f32 %v565, 1.0
        %v570 = vadd.f32 %v566, 1.0
        %v571 = vmul.f32 %v555, %v567
        %v572 = vmul.f32 %v556, %v568
        %v573 = vmul.f32 %v557, %v569
        %v574 = vmul.f32 %v558, %v570
        %v575 = vmul.f32 %v571, %v537
        %v576 = vmul.f32 %v572, %v542
        %v577 = vmul.f32 %v573, %v547
        %v578 = vmul.f32 %v574, %v552
        %v579 = vld [vmem:[%s5] sm:$0xf]
        %v580 = vld [vmem:[%s6] sm:$0xf]
        %582 = vset.pattern.permute.xlu0 0
        %583 = vperm.xlu0 %582, %v580
        %v584 = vpop.permute.xlu0 %583
        %vm586 = vcmask 261120
        %v588 = vsel %vm586, %v579, 0
        %590 = vmatprep.subr.mxu0 0.0
        %591 = vmatpush1.msra.mxu0 %v575
        %592 = vmatprep.subr.mxu0 0.0
        %593 = vmatpush1.msra.mxu0 %v576
        %594 = vmatprep.subr.mxu0 0.0
        %595 = vmatpush1.msra.mxu0 %v577
        %596 = vmatprep.subr.mxu0 0.0
        %597 = vmatpush1.msra.mxu0 %v578
        %598 = vmatprep.subr.mxu0 0.0
        %599 = vmatpush1.msra.mxu0 0.0
        %600 = vmatprep.subr.mxu0 0.0
        %601 = vmatpush1.msra.mxu0 0.0
        %602 = vmatprep.subr.mxu0 0.0
        %603 = vmatpush1.msra.mxu0 0.0
        %604 = vmatprep.subr.mxu0 0.0
        %605 = vmatpush1.msra.mxu0 0.0
        %606 = vmatprep.subr.mxu0 0.0
        %607 = vmatpush1.msra.mxu0 0.0
        %608 = vmatprep.subr.mxu0 0.0
        %609 = vmatpush1.msra.mxu0 0.0
        %610 = vmatprep.subr.mxu0 0.0
        %611 = vmatpush1.msra.mxu0 0.0
        %612 = vmatprep.subr.mxu0 0.0
        %613 = vmatpush1.msra.mxu0 0.0
        %614 = vmatprep.subr.mxu0 0.0
        %615 = vmatpush1.msra.mxu0 0.0
        %616 = vmatprep.subr.mxu0 0.0
        %617 = vmatpush1.msra.mxu0 0.0
        %618 = vmatprep.subr.mxu0 0.0
        %619 = vmatpush1.msra.mxu0 0.0
        %620 = vmatprep.subr.mxu0 0.0
        %621 = vmatpush1.msra.mxu0 0.0
        %622 = vmatprep.subr.mxu0 0.0
        %623 = vmatpush1.msra.mxu0 0.0
        %624 = vmatprep.subr.mxu0 0.0
        %625 = vmatpush1.msra.mxu0 0.0
        %626 = vmatprep.subr.mxu0 0.0
        %627 = vmatpush1.msra.mxu0 0.0
        %628 = vmatprep.subr.mxu0 0.0
        %629 = vmatpush1.msra.mxu0 0.0
        %630 = vmatprep.subr.mxu0 0.0
        %631 = vmatpush1.msra.mxu0 0.0
        %632 = vmatprep.subr.mxu0 0.0
        %633 = vmatpush1.msra.mxu0 0.0
        %634 = vmatprep.subr.mxu0 0.0
        %635 = vmatpush1.msra.mxu0 0.0
        %636 = vmatprep.subr.mxu0 0.0
        %637 = vmatpush1.msra.mxu0 0.0
        %638 = vmatprep.subr.mxu0 0.0
        %639 = vmatpush1.msra.mxu0 0.0
        %640 = vmatprep.subr.mxu0 0.0
        %641 = vmatpush1.msra.mxu0 0.0
        %642 = vmatprep.subr.mxu0 0.0
        %643 = vmatpush1.msra.mxu0 0.0
        %644 = vmatprep.subr.mxu0 0.0
        %645 = vmatpush1.msra.mxu0 0.0
        %646 = vmatprep.subr.mxu0 0.0
        %647 = vmatpush1.msra.mxu0 0.0
        %648 = vmatprep.subr.mxu0 0.0
        %649 = vmatpush1.msra.mxu0 0.0
        %650 = vmatprep.subr.mxu0 0.0
        %651 = vmatpush1.msra.mxu0 0.0
        %652 = vmatprep.subr.mxu0 0.0
        %653 = vmatpush1.msra.mxu0 0.0
        %654 = vmatprep.mubr.f32.mxu0 0.0
        %655 = vmatmul.mubr.f32.gmra.mrb[0].mxu0 %v588
        %v656 = vpop.f32.mrb[0].mxu0
        %v657 = vadd.f32 %v584, %v656
        %v658 = vpop.f32.mrb[0].mxu0
        %659 = vdwg.mxu0
        %vm660 = vcmask 125952
        %661 = vst.msk [vmem:[%s291] sm:$0xf] %vm660, %v657
        %s662 = sand.u32 %s197, 1
        %s663 = scalar_lea.sflag [#allocation4], %s662
        %s664 = sand.u32 %s197, 1
        %s665 = smul.addr %s664, 4
        %s666 = scalar_lea.vmem [#allocation3], %s665
        // Predicated region
        $region49: #{tpu_custom_call.1} parent=47 // pred_check
          %p667 = pneg %p207
        $region50: #{tpu_custom_call.1} parent=47 // pred_check_branch
          %669 = sbr.rel (%p667) target = $region52
        $region51: #{tpu_custom_call.1} parent=47 // pred_region
          %s671 = ssub.s32 64, 64
          %672 = vsyncadd %s663, %s671
          %s673 = sadd.s32 %s26, %s25
          %s674 = smul.addr %s673, 64
          %s675 = scalar_lea.hbm %s7, %s674
          %s677 = sshll.u32 %s666, 4
          %s678 = int_to_ptr.vmem [resolvable:$true] %s677
          %680 = dma.vmem_to_hbm [thread:$0]  %s678, 64, %s675, %s663
        $region52: #{tpu_custom_call.1} parent=47 // pred_fallthru
          _
      $region48: #{tpu_custom_call.1} parent=5 // pred_fallthru
        _
      %p681 = scmp.le.s32.totalorder 2, %s16
      // Predicated region
      $region53: #{tpu_custom_call.1} parent=5 // pred_check
        %p682 = pneg %p681
      $region54: #{tpu_custom_call.1} parent=5 // pred_check_branch
        %684 = sbr.rel (%p682) target = $region56
      $region55: #{tpu_custom_call.1} parent=5 // pred_region
        %s685 = ssub.s32 %s16, 2
        // Predicated region
        $region57: #{tpu_custom_call.1} parent=55 // pred_check
          %p686 = pneg %p213
        $region58: #{tpu_custom_call.1} parent=55 // pred_check_branch
          %688 = sbr.rel (%p686) target = $region60
        $region59: #{tpu_custom_call.1} parent=55 // pred_region
          %s689 = sand.u32 %s198, 1
          %s690 = scalar_lea.sflag [#allocation4], %s689
          %s691 = sand.u32 %s198, 1
          %s692 = smul.addr %s691, 4
          %s693 = scalar_lea.vmem [#allocation3], %s692
          %694 = dma.done %s690, 64
        $region60: #{tpu_custom_call.1} parent=55 // pred_fallthru
          _
      $region56: #{tpu_custom_call.1} parent=5 // pred_fallthru
        _
    $region6: #{tpu_custom_call.1} parent=1 // loop_footer
      %s20 = sadd.s32 1, %s16
    $region7: #{tpu_custom_call.1} parent=1 // loop_footer_branch
      %15 = sbr.rel target = $region3
    $region8: #{tpu_custom_call.1} parent=1 // loop_exit
      _
    %695 = vsyncpa [#allocation4], 1
    %s696 = scalar_lea.sflag [#allocation4], 1
    %697 = vsyncpa %s696, 1

// kernel: tpu_custom_call.1
$region0: #{tpu_custom_call.1}
  #allocation0 [shape = 'u32[]', space=smem, size = 0x4, offset = 0x4, fixed_abs, tag = 'smem constant byte address 0x4 - core index']
  #allocation1 [shape = 'u32[144,128]{1,0:T(1,128)}', space=vmem, size = 0x12000, scoped, tag = 'internal scratch']
  #allocation2 [shape = 'f32[4,16]{1,0:T(4,128)}', space=vmem, size = 0x800, scoped, tag = 'scratch operand']
  %s0 = inlined_call_operand.vmem [shape: f32[2,4,16], index: 0, kind: input, shape index: {}]
  %s1 = inlined_call_operand.vmem [shape: f32[32,4], index: 1, kind: input, shape index: {}]
  %s2 = inlined_call_operand.vmem [shape: f32[32,4], index: 2, kind: input, shape index: {}]
  %s3 = inlined_call_operand.vmem [shape: f32[32,1], index: 3, kind: input, shape index: {}]
  %s4 = inlined_call_operand.vmem [shape: f32[32,1], index: 4, kind: input, shape index: {}]
  %s5 = inlined_call_operand.vmem [shape: f32[4,32], index: 5, kind: input, shape index: {}]
  %s6 = inlined_call_operand.vmem [shape: f32[4,1], index: 6, kind: input, shape index: {}]
  %s7 = inlined_call_operand.hbm [shape: f32[2,4,16], index: 7, kind: output, shape index: {}]
  %s8 = sld [smem:[#allocation0]]
  $region61: #{tpu_custom_call.1} parent=0
    _
  %s10 = ssub.s32 1, %s8
  %s11 = scalar_select 0, %s10, %s8
  $region1: #{tpu_custom_call.1} parent=0
    #allocation3 [shape = 'u8[4096]{0}', space=vmem, size = 0x1000, scoped, tag = 'output window, operand 0']
    #allocation4 [shape = 's32[2]{0}', space=sflag, size = 0x8, scoped, tag = 'scoped memory for tpu_custom_call.1']
    %12 = vsyncpa [#allocation4], 0
    %s13 = scalar_lea.sflag [#allocation4], 1
    %14 = vsyncpa %s13, 0
    loop: start=0, step=1, limit=4
    $region2: #{tpu_custom_call.1} parent=1 // loop_pre_header
      _
    $region3: #{tpu_custom_call.1} parent=1 // loop_header
      %s16 = sphi 0, %s20
      %p17 = scmp.ge.s32.totalorder %s16, 4
      %s23 = sphi 0, %s35
      %s24 = sphi 0, %s31
      %s25 = sphi 0, %s23
      %s26 = sphi 0, %s24
      %s27 = sphi 0, %s25
      %s28 = sphi 0, %s26
      %s40 = sphi 0, %s42
      %s43 = sphi 0, %s40
      %s44 = sphi 0, %s43
      %s60 = sphi 0, %s44
      %s64 = sphi 0, %s64
      %s66 = sphi 0, %s64
      %s67 = sphi 0, %s66
      %s81 = sphi 0, %s67
      %s85 = sphi 0, %s85
      %s87 = sphi 0, %s85
      %s88 = sphi 0, %s87
      %s102 = sphi 0, %s88
      %s106 = sphi 0, %s106
      %s108 = sphi 0, %s106
      %s109 = sphi 0, %s108
      %s123 = sphi 0, %s109
      %s127 = sphi 0, %s127
      %s129 = sphi 0, %s127
      %s130 = sphi 0, %s129
      %s144 = sphi 0, %s130
      %s148 = sphi 0, %s148
      %s150 = sphi 0, %s148
      %s151 = sphi 0, %s150
      %s165 = sphi 0, %s151
      %s169 = sphi 0, %s169
      %s171 = sphi 0, %s169
      %s172 = sphi 0, %s171
      %s186 = sphi 0, %s172
      %s194 = sphi 0, %s196
      %s197 = sphi 0, %s194
      %s198 = sphi 0, %s197
      %s214 = sphi 0, %s198
    $region4: #{tpu_custom_call.1} parent=1 // loop_header_branch
      %19 = sbr.rel (%p17) target = $region8
    $region5: #{tpu_custom_call.1} parent=1 // loop_body
      %s21 = ssub.s32 %s16, 1
      %s22 = ssub.s32 %s16, 2
      %s29 = sadd.s32 1, %s24
      %p30 = scmp.ge.s32.totalorder %s29, 1
      %s31 = scalar_select %p30, 0, %s29
      %s32 = sadd.s32 1, %s23
      %s33 = scalar_select %p30, %s32, %s23
      %p34 = scmp.ge.s32.totalorder %s33, 2
      %s35 = scalar_select %p34, 0, %s33
      %s36 = ssub.s32 %s23, %s35
      %s37 = ssub.s32 %s24, %s31
      %s38 = sor.u32 %s36, %s37
      %p39 = scmp.eq.s32.totalorder %s38, 0
      %s41 = sadd.s32 %s40, 1
      %s42 = scalar_select %p39, %s40, %s41
      %p45 = pneg %p39
      %p46 = scmp.eq.s32.totalorder %s16, 1
      %p47 = por %p45, %p46
      %p48 = scmp.ne.s32.totalorder %s40, %s43
      %p49 = scmp.eq.s32.totalorder %s16, 0
      %p50 = por %p48, %p49
      %p51 = scmp.ne.s32.totalorder %s40, %s43
      %p52 = scmp.eq.s32.totalorder %s21, 1
      %p53 = por %p51, %p52
      %p54 = scmp.ne.s32.totalorder %s43, %s44
      %p55 = scmp.eq.s32.totalorder %s21, 0
      %p56 = por %p54, %p55
      %p57 = scmp.ne.s32.totalorder %s43, %s44
      %p58 = scmp.eq.s32.totalorder %s22, 1
      %p59 = por %p57, %p58
      %p61 = scmp.ne.s32.totalorder %s44, %s60
      %p62 = scmp.eq.s32.totalorder %s22, 0
      %p63 = por %p61, %p62
      %s65 = sadd.s32 %s64, 1
      %p68 = scmp.eq.s32.totalorder %s16, 1
      %p69 = scmp.ne.s32.totalorder %s64, %s66
      %p70 = scmp.eq.s32.totalorder %s16, 0
      %p71 = por %p69, %p70
      %p72 = scmp.ne.s32.totalorder %s64, %s66
      %p73 = scmp.eq.s32.totalorder %s21, 1
      %p74 = por %p72, %p73
      %p75 = scmp.ne.s32.totalorder %s66, %s67
      %p76 = scmp.eq.s32.totalorder %s21, 0
      %p77 = por %p75, %p76
      %p78 = scmp.ne.s32.totalorder %s66, %s67
      %p79 = scmp.eq.s32.totalorder %s22, 1
      %p80 = por %p78, %p79
      %p82 = scmp.ne.s32.totalorder %s67, %s81
      %p83 = scmp.eq.s32.totalorder %s22, 0
      %p84 = por %p82, %p83
      %s86 = sadd.s32 %s85, 1
      %p89 = scmp.eq.s32.totalorder %s16, 1
      %p90 = scmp.ne.s32.totalorder %s85, %s87
      %p91 = scmp.eq.s32.totalorder %s16, 0
      %p92 = por %p90, %p91
      %p93 = scmp.ne.s32.totalorder %s85, %s87
      %p94 = scmp.eq.s32.totalorder %s21, 1
      %p95 = por %p93, %p94
      %p96 = scmp.ne.s32.totalorder %s87, %s88
      %p97 = scmp.eq.s32.totalorder %s21, 0
      %p98 = por %p96, %p97
      %p99 = scmp.ne.s32.totalorder %s87, %s88
      %p100 = scmp.eq.s32.totalorder %s22, 1
      %p101 = por %p99, %p100
      %p103 = scmp.ne.s32.totalorder %s88, %s102
      %p104 = scmp.eq.s32.totalorder %s22, 0
      %p105 = por %p103, %p104
      %s107 = sadd.s32 %s106, 1
      %p110 = scmp.eq.s32.totalorder %s16, 1
      %p111 = scmp.ne.s32.totalorder %s106, %s108
      %p112 = scmp.eq.s32.totalorder %s16, 0
      %p113 = por %p111, %p112
      %p114 = scmp.ne.s32.totalorder %s106, %s108
      %p115 = scmp.eq.s32.totalorder %s21, 1
      %p116 = por %p114, %p115
      %p117 = scmp.ne.s32.totalorder %s108, %s109
      %p118 = scmp.eq.s32.totalorder %s21, 0
      %p119 = por %p117, %p118
      %p120 = scmp.ne.s32.totalorder %s108, %s109
      %p121 = scmp.eq.s32.totalorder %s22, 1
      %p122 = por %p120, %p121
      %p124 = scmp.ne.s32.totalorder %s109, %s123
      %p125 = scmp.eq.s32.totalorder %s22, 0
      %p126 = por %p124, %p125
      %s128 = sadd.s32 %s127, 1
      %p131 = scmp.eq.s32.totalorder %s16, 1
      %p132 = scmp.ne.s32.totalorder %s127, %s129
      %p133 = scmp.eq.s32.totalorder %s16, 0
      %p134 = por %p132, %p133
      %p135 = scmp.ne.s32.totalorder %s127, %s129
      %p136 = scmp.eq.s32.totalorder %s21, 1
      %p137 = por %p135, %p136
      %p138 = scmp.ne.s32.totalorder %s129, %s130
      %p139 = scmp.eq.s32.totalorder %s21, 0
      %p140 = por %p138, %p139
      %p141 = scmp.ne.s32.totalorder %s129, %s130
      %p142 = scmp.eq.s32.totalorder %s22, 1
      %p143 = por %p141, %p142
      %p145 = scmp.ne.s32.totalorder %s130, %s144
      %p146 = scmp.eq.s32.totalorder %s22, 0
      %p147 = por %p145, %p146
      %s149 = sadd.s32 %s148, 1
      %p152 = scmp.eq.s32.totalorder %s16, 1
      %p153 = scmp.ne.s32.totalorder %s148, %s150
      %p154 = scmp.eq.s32.totalorder %s16, 0
      %p155 = por %p153, %p154
      %p156 = scmp.ne.s32.totalorder %s148, %s150
      %p157 = scmp.eq.s32.totalorder %s21, 1
      %p158 = por %p156, %p157
      %p159 = scmp.ne.s32.totalorder %s150, %s151
      %p160 = scmp.eq.s32.totalorder %s21, 0
      %p161 = por %p159, %p160
      %p162 = scmp.ne.s32.totalorder %s150, %s151
      %p163 = scmp.eq.s32.totalorder %s22, 1
      %p164 = por %p162, %p163
      %p166 = scmp.ne.s32.totalorder %s151, %s165
      %p167 = scmp.eq.s32.totalorder %s22, 0
      %p168 = por %p166, %p167
      %s170 = sadd.s32 %s169, 1
      %p173 = scmp.eq.s32.totalorder %s16, 1
      %p174 = scmp.ne.s32.totalorder %s169, %s171
      %p175 = scmp.eq.s32.totalorder %s16, 0
      %p176 = por %p174, %p175
      %p177 = scmp.ne.s32.totalorder %s169, %s171
      %p178 = scmp.eq.s32.totalorder %s21, 1
      %p179 = por %p177, %p178
      %p180 = scmp.ne.s32.totalorder %s171, %s172
      %p181 = scmp.eq.s32.totalorder %s21, 0
      %p182 = por %p180, %p181
      %p183 = scmp.ne.s32.totalorder %s171, %s172
      %p184 = scmp.eq.s32.totalorder %s22, 1
      %p185 = por %p183, %p184
      %p187 = scmp.ne.s32.totalorder %s172, %s186
      %p188 = scmp.eq.s32.totalorder %s22, 0
      %p189 = por %p187, %p188
      %s190 = ssub.s32 %s23, %s35
      %s191 = ssub.s32 %s24, %s31
      %s192 = sor.u32 %s190, %s191
      %p193 = scmp.eq.s32.totalorder %s192, 0
      %s195 = sadd.s32 %s194, 1
      %s196 = scalar_select %p193, %s194, %s195
      %p199 = pneg %p193
      %p200 = scmp.eq.s32.totalorder %s16, 1
      %p201 = por %p199, %p200
      %p202 = scmp.ne.s32.totalorder %s194, %s197
      %p203 = scmp.eq.s32.totalorder %s16, 0
      %p204 = por %p202, %p203
      %p205 = scmp.ne.s32.totalorder %s194, %s197
      %p206 = scmp.eq.s32.totalorder %s21, 1
      %p207 = por %p205, %p206
      %p208 = scmp.ne.s32.totalorder %s197, %s198
      %p209 = scmp.eq.s32.totalorder %s21, 0
      %p210 = por %p208, %p209
      %p211 = scmp.ne.s32.totalorder %s197, %s198
      %p212 = scmp.eq.s32.totalorder %s22, 1
      %p213 = por %p211, %p212
      %p215 = scmp.ne.s32.totalorder %s198, %s214
      %p216 = scmp.eq.s32.totalorder %s22, 0
      %p217 = por %p215, %p216
      %p218 = scmp.le.s32.totalorder 1, %s16
      %p219 = scmp.lt.s32.totalorder %s16, 3
      %p220 = pnand %p218, %p219
      %p221 = pneg %p220
      // Predicated region
      $region9: #{tpu_custom_call.1} parent=5 // pred_check
        _
      $region10: #{tpu_custom_call.1} parent=5 // pred_check_branch
        %223 = sbr.rel (%p220) target = $region12
      $region11: #{tpu_custom_call.1} parent=5 // pred_region
        %s224 = ssub.s32 %s16, 1
        // Predicated region
        $region13: #{tpu_custom_call.1} parent=11 // pred_check
          %p225 = pneg %p77
        $region14: #{tpu_custom_call.1} parent=11 // pred_check_branch
          %227 = sbr.rel (%p225) target = $region16
        $region15: #{tpu_custom_call.1} parent=11 // pred_region
          _
        $region16: #{tpu_custom_call.1} parent=11 // pred_fallthru
          _
        // Predicated region
        $region17: #{tpu_custom_call.1} parent=11 // pred_check
          %p228 = pneg %p98
        $region18: #{tpu_custom_call.1} parent=11 // pred_check_branch
          %230 = sbr.rel (%p228) target = $region20
        $region19: #{tpu_custom_call.1} parent=11 // pred_region
          _
        $region20: #{tpu_custom_call.1} parent=11 // pred_fallthru
          _
        // Predicated region
        $region21: #{tpu_custom_call.1} parent=11 // pred_check
          %p231 = pneg %p119
        $region22: #{tpu_custom_call.1} parent=11 // pred_check_branch
          %233 = sbr.rel (%p231) target = $region24
        $region23: #{tpu_custom_call.1} parent=11 // pred_region
          _
        $region24: #{tpu_custom_call.1} parent=11 // pred_fallthru
          _
        // Predicated region
        $region25: #{tpu_custom_call.1} parent=11 // pred_check
          %p234 = pneg %p140
        $region26: #{tpu_custom_call.1} parent=11 // pred_check_branch
          %236 = sbr.rel (%p234) target = $region28
        $region27: #{tpu_custom_call.1} parent=11 // pred_region
          _
        $region28: #{tpu_custom_call.1} parent=11 // pred_fallthru
          _
        // Predicated region
        $region29: #{tpu_custom_call.1} parent=11 // pred_check
          %p237 = pneg %p161
        $region30: #{tpu_custom_call.1} parent=11 // pred_check_branch
          %239 = sbr.rel (%p237) target = $region32
        $region31: #{tpu_custom_call.1} parent=11 // pred_region
          _
        $region32: #{tpu_custom_call.1} parent=11 // pred_fallthru
          _
        // Predicated region
        $region33: #{tpu_custom_call.1} parent=11 // pred_check
          %p240 = pneg %p182
        $region34: #{tpu_custom_call.1} parent=11 // pred_check_branch
          %242 = sbr.rel (%p240) target = $region36
        $region35: #{tpu_custom_call.1} parent=11 // pred_region
          _
        $region36: #{tpu_custom_call.1} parent=11 // pred_fallthru
          _
      $region12: #{tpu_custom_call.1} parent=5 // pred_fallthru
        _
      %p243 = scmp.lt.s32.totalorder %s16, 2
      // Predicated region
      $region37: #{tpu_custom_call.1} parent=5 // pred_check
        %p244 = pneg %p243
      $region38: #{tpu_custom_call.1} parent=5 // pred_check_branch
        %246 = sbr.rel (%p244) target = $region40
      $region39: #{tpu_custom_call.1} parent=5 // pred_region
        // Predicated region
        $region41: #{tpu_custom_call.1} parent=39 // pred_check
          %p247 = pneg %p50
        $region42: #{tpu_custom_call.1} parent=39 // pred_check_branch
          %249 = sbr.rel (%p247) target = $region44
        $region43: #{tpu_custom_call.1} parent=39 // pred_region
          %p250 = scmp.lt.s32.totalorder %s23, 1
          %s251 = scalar_select %p250, %s23, 1
          %p252 = scmp.lt.s32.totalorder %s24, 0
          %s253 = scalar_select %p252, %s24, 0
          %s254 = sadd.s32 %s253, %s251
          %s255 = smul.addr %s254, 4
          %s256 = scalar_lea.vmem %s0, %s255
        $region44: #{tpu_custom_call.1} parent=39 // pred_fallthru
          _
      $region40: #{tpu_custom_call.1} parent=5 // pred_fallthru
        _
      %p257 = scmp.le.s32.totalorder 1, %s16
      %p258 = scmp.lt.s32.totalorder %s16, 3
      %p259 = pnand %p257, %p258
      %p260 = pneg %p259
      // Predicated region
      $region45: #{tpu_custom_call.1} parent=5 // pred_check
        _
      $region46: #{tpu_custom_call.1} parent=5 // pred_check_branch
        %262 = sbr.rel (%p259) target = $region48
      $region47: #{tpu_custom_call.1} parent=5 // pred_region
        %s263 = ssub.s32 %s16, 1
        %p264 = scmp.lt.s32.totalorder %s25, 1
        %s265 = scalar_select %p264, %s25, 1
        %p266 = scmp.lt.s32.totalorder %s26, 0
        %s267 = scalar_select %p266, %s26, 0
        %s268 = sadd.s32 %s267, %s265
        %s269 = smul.addr %s268, 4
        %s270 = scalar_lea.vmem %s0, %s269
        %p271 = pneg %p56
        %p272 = pneg %p53
        %p273 = pneg %p77
        %p274 = pneg %p74
        %p275 = pneg %p98
        %p276 = pneg %p95
        %p277 = pneg %p119
        %p278 = pneg %p116
        %p279 = pneg %p140
        %p280 = pneg %p137
        %p281 = pneg %p161
        %p282 = pneg %p158
        %p283 = pneg %p182
        %p284 = pneg %p179
        %p285 = pneg %p210
        %p286 = pneg %p207
        %s287 = sand.u32 %s197, 1
        %s288 = scalar_lea.sflag [#allocation4], %s287
        %s289 = sand.u32 %s197, 1
        %s290 = smul.addr %s289, 4
        %s291 = scalar_lea.vmem [#allocation3], %s290
        %p292 = scmp.lt.s32.totalorder %s25, 1
        %s293 = scalar_select %p292, %s25, 1
        %p294 = scmp.lt.s32.totalorder %s26, 0
        %s295 = scalar_select %p294, %s26, 0
        %s296 = sadd.s32 %s295, %s293
        %s297 = smul.addr %s296, 4
        %s298 = scalar_lea.vmem %s0, %s297
        %v299 = vld [vmem:[%s298] sm:$0xf]
        %v300 = vld [vmem:[%s1] sm:$0xff]
        %v301 = vld [vmem:[%s1 + $0x8] sm:$0xff]
        %v302 = vld [vmem:[%s1 + $0x10] sm:$0xff]
        %v303 = vld [vmem:[%s1 + $0x18] sm:$0xff]
        %v304 = vld [vmem:[%s3] sm:$0xff]
        %v305 = vld [vmem:[%s3 + $0x8] sm:$0xff]
        %v306 = vld [vmem:[%s3 + $0x10] sm:$0xff]
        %v307 = vld [vmem:[%s3 + $0x18] sm:$0xff]
        %309 = vset.pattern.permute.xlu0 0
        %310 = vperm.xlu0 %309, %v304
        %v311 = vpop.permute.xlu0 %310
        %314 = vset.pattern.permute.xlu0 0
        %315 = vperm.xlu0 %314, %v305
        %v316 = vpop.permute.xlu0 %315
        %319 = vset.pattern.permute.xlu0 0
        %320 = vperm.xlu0 %319, %v306
        %v321 = vpop.permute.xlu0 %320
        %324 = vset.pattern.permute.xlu0 0
        %325 = vperm.xlu0 %324, %v307
        %v326 = vpop.permute.xlu0 %325
        %vm328 = vcmask 31744
        %v330 = vsel %vm328, %v300, 0
        %v333 = vsel %vm328, %v301, 0
        %v336 = vsel %vm328, %v302, 0
        %v339 = vsel %vm328, %v303, 0
        %vm341 = vcmask 1043456
        %v343 = vsel %vm341, %v299, 0
        %345 = vmatprep.subr.mxu0 0.0
        %346 = vmatpush1.msra.mxu0 %v343
        %347 = vmatprep.subr.mxu0 0.0
        %348 = vmatpush1.msra.mxu0 0.0
        %349 = vmatprep.subr.mxu0 0.0
        %350 = vmatpush1.msra.mxu0 0.0
        %351 = vmatprep.subr.mxu0 0.0
        %352 = vmatpush1.msra.mxu0 0.0
        %353 = vmatprep.subr.mxu0 0.0
        %354 = vmatpush1.msra.mxu0 0.0
        %355 = vmatprep.subr.mxu0 0.0
        %356 = vmatpush1.msra.mxu0 0.0
        %357 = vmatprep.subr.mxu0 0.0
        %358 = vmatpush1.msra.mxu0 0.0
        %359 = vmatprep.subr.mxu0 0.0
        %360 = vmatpush1.msra.mxu0 0.0
        %361 = vmatprep.subr.mxu0 0.0
        %362 = vmatpush1.msra.mxu0 0.0
        %363 = vmatprep.subr.mxu0 0.0
        %364 = vmatpush1.msra.mxu0 0.0
        %365 = vmatprep.subr.mxu0 0.0
        %366 = vmatpush1.msra.mxu0 0.0
        %367 = vmatprep.subr.mxu0 0.0
        %368 = vmatpush1.msra.mxu0 0.0
        %369 = vmatprep.subr.mxu0 0.0
        %370 = vmatpush1.msra.mxu0 0.0
        %371 = vmatprep.subr.mxu0 0.0
        %372 = vmatpush1.msra.mxu0 0.0
        %373 = vmatprep.subr.mxu0 0.0
        %374 = vmatpush1.msra.mxu0 0.0
        %375 = vmatprep.subr.mxu0 0.0
        %376 = vmatpush1.msra.mxu0 0.0
        %377 = vmatprep.subr.mxu0 0.0
        %378 = vmatpush1.msra.mxu0 0.0
        %379 = vmatprep.subr.mxu0 0.0
        %380 = vmatpush1.msra.mxu0 0.0
        %381 = vmatprep.subr.mxu0 0.0
        %382 = vmatpush1.msra.mxu0 0.0
        %383 = vmatprep.subr.mxu0 0.0
        %384 = vmatpush1.msra.mxu0 0.0
        %385 = vmatprep.subr.mxu0 0.0
        %386 = vmatpush1.msra.mxu0 0.0
        %387 = vmatprep.subr.mxu0 0.0
        %388 = vmatpush1.msra.mxu0 0.0
        %389 = vmatprep.subr.mxu0 0.0
        %390 = vmatpush1.msra.mxu0 0.0
        %391 = vmatprep.subr.mxu0 0.0
        %392 = vmatpush1.msra.mxu0 0.0
        %393 = vmatprep.subr.mxu0 0.0
        %394 = vmatpush1.msra.mxu0 0.0
        %395 = vmatprep.subr.mxu0 0.0
        %396 = vmatpush1.msra.mxu0 0.0
        %397 = vmatprep.subr.mxu0 0.0
        %398 = vmatpush1.msra.mxu0 0.0
        %399 = vmatprep.subr.mxu0 0.0
        %400 = vmatpush1.msra.mxu0 0.0
        %401 = vmatprep.subr.mxu0 0.0
        %402 = vmatpush1.msra.mxu0 0.0
        %403 = vmatprep.subr.mxu0 0.0
        %404 = vmatpush1.msra.mxu0 0.0
        %405 = vmatprep.subr.mxu0 0.0
        %406 = vmatpush1.msra.mxu0 0.0
        %407 = vmatprep.subr.mxu0 0.0
        %408 = vmatpush1.msra.mxu0 0.0
        %409 = vmatprep.mubr.f32.mxu0 0.0
        %410 = vmatmul.mubr.f32.gmra.mrb[0].mxu0 %v330
        %v411 = vpop.f32.mrb[0].mxu0
        %v412 = vadd.f32 %v311, %v411
        %v413 = vpop.f32.mrb[0].mxu0
        %414 = vmatprep.mubr.f32.mxu0 0.0
        %415 = vmatmul.mubr.f32.gmra.mrb[0].mxu0 %v333
        %v416 = vpop.f32.mrb[0].mxu0
        %v417 = vadd.f32 %v316, %v416
        %v418 = vpop.f32.mrb[0].mxu0
        %419 = vmatprep.mubr.f32.mxu0 0.0
        %420 = vmatmul.mubr.f32.gmra.mrb[0].mxu0 %v336
        %v421 = vpop.f32.mrb[0].mxu0
        %v422 = vadd.f32 %v321, %v421
        %v423 = vpop.f32.mrb[0].mxu0
        %424 = vmatprep.mubr.f32.mxu0 0.0
        %425 = vmatmul.mubr.f32.gmra.mrb[0].mxu0 %v339
        %v426 = vpop.f32.mrb[0].mxu0
        %v427 = vadd.f32 %v326, %v426
        %v428 = vpop.f32.mrb[0].mxu0
        %429 = vdwg.mxu0
        %v430 = vld [vmem:[%s2] sm:$0xff]
        %v431 = vld [vmem:[%s2 + $0x8] sm:$0xff]
        %v432 = vld [vmem:[%s2 + $0x10] sm:$0xff]
        %v433 = vld [vmem:[%s2 + $0x18] sm:$0xff]
        %v434 = vld [vmem:[%s4] sm:$0xff]
        %v435 = vld [vmem:[%s4 + $0x8] sm:$0xff]
        %v436 = vld [vmem:[%s4 + $0x10] sm:$0xff]
        %v437 = vld [vmem:[%s4 + $0x18] sm:$0xff]
        %439 = vset.pattern.permute.xlu0 0
        %440 = vperm.xlu0 %439, %v434
        %v441 = vpop.permute.xlu0 %440
        %444 = vset.pattern.permute.xlu0 0
        %445 = vperm.xlu0 %444, %v435
        %v446 = vpop.permute.xlu0 %445
        %449 = vset.pattern.permute.xlu0 0
        %450 = vperm.xlu0 %449, %v436
        %v451 = vpop.permute.xlu0 %450
        %454 = vset.pattern.permute.xlu0 0
        %455 = vperm.xlu0 %454, %v437
        %v456 = vpop.permute.xlu0 %455
        %v459 = vsel %vm328, %v430, 0
        %v462 = vsel %vm328, %v431, 0
        %v465 = vsel %vm328, %v432, 0
        %v468 = vsel %vm328, %v433, 0
        %470 = vmatprep.subr.mxu0 0.0
        %471 = vmatpush1.msra.mxu0 %v343
        %472 = vmatprep.subr.mxu0 0.0
        %473 = vmatpush1.msra.mxu0 0.0
        %474 = vmatprep.subr.mxu0 0.0
        %475 = vmatpush1.msra.mxu0 0.0
        %476 = vmatprep.subr.mxu0 0.0
        %477 = vmatpush1.msra.mxu0 0.0
        %478 = vmatprep.subr.mxu0 0.0
        %479 = vmatpush1.msra.mxu0 0.0
        %480 = vmatprep.subr.mxu0 0.0
        %481 = vmatpush1.msra.mxu0 0.0
        %482 = vmatprep.subr.mxu0 0.0
        %483 = vmatpush1.msra.mxu0 0.0
        %484 = vmatprep.subr.mxu0 0.0
        %485 = vmatpush1.msra.mxu0 0.0
        %486 = vmatprep.subr.mxu0 0.0
        %487 = vmatpush1.msra.mxu0 0.0
        %488 = vmatprep.subr.mxu0 0.0
        %489 = vmatpush1.msra.mxu0 0.0
        %490 = vmatprep.subr.mxu0 0.0
        %491 = vmatpush1.msra.mxu0 0.0
        %492 = vmatprep.subr.mxu0 0.0
        %493 = vmatpush1.msra.mxu0 0.0
        %494 = vmatprep.subr.mxu0 0.0
        %495 = vmatpush1.msra.mxu0 0.0
        %496 = vmatprep.subr.mxu0 0.0
        %497 = vmatpush1.msra.mxu0 0.0
        %498 = vmatprep.subr.mxu0 0.0
        %499 = vmatpush1.msra.mxu0 0.0
        %500 = vmatprep.subr.mxu0 0.0
        %501 = vmatpush1.msra.mxu0 0.0
        %502 = vmatprep.subr.mxu0 0.0
        %503 = vmatpush1.msra.mxu0 0.0
        %504 = vmatprep.subr.mxu0 0.0
        %505 = vmatpush1.msra.mxu0 0.0
        %506 = vmatprep.subr.mxu0 0.0
        %507 = vmatpush1.msra.mxu0 0.0
        %508 = vmatprep.subr.mxu0 0.0
        %509 = vmatpush1.msra.mxu0 0.0
        %510 = vmatprep.subr.mxu0 0.0
        %511 = vmatpush1.msra.mxu0 0.0
        %512 = vmatprep.subr.mxu0 0.0
        %513 = vmatpush1.msra.mxu0 0.0
        %514 = vmatprep.subr.mxu0 0.0
        %515 = vmatpush1.msra.mxu0 0.0
        %516 = vmatprep.subr.mxu0 0.0
        %517 = vmatpush1.msra.mxu0 0.0
        %518 = vmatprep.subr.mxu0 0.0
        %519 = vmatpush1.msra.mxu0 0.0
        %520 = vmatprep.subr.mxu0 0.0
        %521 = vmatpush1.msra.mxu0 0.0
        %522 = vmatprep.subr.mxu0 0.0
        %523 = vmatpush1.msra.mxu0 0.0
        %524 = vmatprep.subr.mxu0 0.0
        %525 = vmatpush1.msra.mxu0 0.0
        %526 = vmatprep.subr.mxu0 0.0
        %527 = vmatpush1.msra.mxu0 0.0
        %528 = vmatprep.subr.mxu0 0.0
        %529 = vmatpush1.msra.mxu0 0.0
        %530 = vmatprep.subr.mxu0 0.0
        %531 = vmatpush1.msra.mxu0 0.0
        %532 = vmatprep.subr.mxu0 0.0
        %533 = vmatpush1.msra.mxu0 0.0
        %534 = vmatprep.mubr.f32.mxu0 0.0
        %535 = vmatmul.mubr.f32.gmra.mrb[0].mxu0 %v459
        %v536 = vpop.f32.mrb[0].mxu0
        %v537 = vadd.f32 %v441, %v536
        %v538 = vpop.f32.mrb[0].mxu0
        %539 = vmatprep.mubr.f32.mxu0 0.0
        %540 = vmatmul.mubr.f32.gmra.mrb[0].mxu0 %v462
        %v541 = vpop.f32.mrb[0].mxu0
        %v542 = vadd.f32 %v446, %v541
        %v543 = vpop.f32.mrb[0].mxu0
        %544 = vmatprep.mubr.f32.mxu0 0.0
        %545 = vmatmul.mubr.f32.gmra.mrb[0].mxu0 %v465
        %v546 = vpop.f32.mrb[0].mxu0
        %v547 = vadd.f32 %v451, %v546
        %v548 = vpop.f32.mrb[0].mxu0
        %549 = vmatprep.mubr.f32.mxu0 0.0
        %550 = vmatmul.mubr.f32.gmra.mrb[0].mxu0 %v468
        %v551 = vpop.f32.mrb[0].mxu0
        %v552 = vadd.f32 %v456, %v551
        %v553 = vpop.f32.mrb[0].mxu0
        %554 = vdwg.mxu0
        %v555 = vmul.f32 %v412, 0.5
        %v556 = vmul.f32 %v417, 0.5
        %v557 = vmul.f32 %v422, 0.5
        %v558 = vmul.f32 %v427, 0.5
        %v559 = vmul.f32 %v412, 0.70710677
        %v560 = vmul.f32 %v417, 0.70710677
        %v561 = vmul.f32 %v422, 0.70710677
        %v562 = vmul.f32 %v427, 0.70710677
        %v563 = verf.f32.pop %v559
        %v564 = verf.f32.pop %v560
        %v565 = verf.f32.pop %v561
        %v566 = verf.f32.pop %v562
        %v567 = vadd.f32 %v563, 1.0
        %v568 = vadd.f32 %v564, 1.0
        %v569 = vadd.f32 %v565, 1.0
        %v570 = vadd.f32 %v566, 1.0
        %v571 = vmul.f32 %v555, %v567
        %v572 = vmul.f32 %v556, %v568
        %v573 = vmul.f32 %v557, %v569
        %v574 = vmul.f32 %v558, %v570
        %v575 = vmul.f32 %v571, %v537
        %v576 = vmul.f32 %v572, %v542
        %v577 = vmul.f32 %v573, %v547
        %v578 = vmul.f32 %v574, %v552
        %v579 = vld [vmem:[%s5] sm:$0xf]
        %v580 = vld [vmem:[%s6] sm:$0xf]
        %582 = vset.pattern.permute.xlu0 0
        %583 = vperm.xlu0 %582, %v580
        %v584 = vpop.permute.xlu0 %583
        %vm586 = vcmask 261120
        %v588 = vsel %vm586, %v579, 0
        %590 = vmatprep.subr.mxu0 0.0
        %591 = vmatpush1.msra.mxu0 %v575
        %592 = vmatprep.subr.mxu0 0.0
        %593 = vmatpush1.msra.mxu0 %v576
        %594 = vmatprep.subr.mxu0 0.0
        %595 = vmatpush1.msra.mxu0 %v577
        %596 = vmatprep.subr.mxu0 0.0
        %597 = vmatpush1.msra.mxu0 %v578
        %598 = vmatprep.subr.mxu0 0.0
        %599 = vmatpush1.msra.mxu0 0.0
        %600 = vmatprep.subr.mxu0 0.0
        %601 = vmatpush1.msra.mxu0 0.0
        %602 = vmatprep.subr.mxu0 0.0
        %603 = vmatpush1.msra.mxu0 0.0
        %604 = vmatprep.subr.mxu0 0.0
        %605 = vmatpush1.msra.mxu0 0.0
        %606 = vmatprep.subr.mxu0 0.0
        %607 = vmatpush1.msra.mxu0 0.0
        %608 = vmatprep.subr.mxu0 0.0
        %609 = vmatpush1.msra.mxu0 0.0
        %610 = vmatprep.subr.mxu0 0.0
        %611 = vmatpush1.msra.mxu0 0.0
        %612 = vmatprep.subr.mxu0 0.0
        %613 = vmatpush1.msra.mxu0 0.0
        %614 = vmatprep.subr.mxu0 0.0
        %615 = vmatpush1.msra.mxu0 0.0
        %616 = vmatprep.subr.mxu0 0.0
        %617 = vmatpush1.msra.mxu0 0.0
        %618 = vmatprep.subr.mxu0 0.0
        %619 = vmatpush1.msra.mxu0 0.0
        %620 = vmatprep.subr.mxu0 0.0
        %621 = vmatpush1.msra.mxu0 0.0
        %622 = vmatprep.subr.mxu0 0.0
        %623 = vmatpush1.msra.mxu0 0.0
        %624 = vmatprep.subr.mxu0 0.0
        %625 = vmatpush1.msra.mxu0 0.0
        %626 = vmatprep.subr.mxu0 0.0
        %627 = vmatpush1.msra.mxu0 0.0
        %628 = vmatprep.subr.mxu0 0.0
        %629 = vmatpush1.msra.mxu0 0.0
        %630 = vmatprep.subr.mxu0 0.0
        %631 = vmatpush1.msra.mxu0 0.0
        %632 = vmatprep.subr.mxu0 0.0
        %633 = vmatpush1.msra.mxu0 0.0
        %634 = vmatprep.subr.mxu0 0.0
        %635 = vmatpush1.msra.mxu0 0.0
        %636 = vmatprep.subr.mxu0 0.0
        %637 = vmatpush1.msra.mxu0 0.0
        %638 = vmatprep.subr.mxu0 0.0
        %639 = vmatpush1.msra.mxu0 0.0
        %640 = vmatprep.subr.mxu0 0.0
        %641 = vmatpush1.msra.mxu0 0.0
        %642 = vmatprep.subr.mxu0 0.0
        %643 = vmatpush1.msra.mxu0 0.0
        %644 = vmatprep.subr.mxu0 0.0
        %645 = vmatpush1.msra.mxu0 0.0
        %646 = vmatprep.subr.mxu0 0.0
        %647 = vmatpush1.msra.mxu0 0.0
        %648 = vmatprep.subr.mxu0 0.0
        %649 = vmatpush1.msra.mxu0 0.0
        %650 = vmatprep.subr.mxu0 0.0
        %651 = vmatpush1.msra.mxu0 0.0
        %652 = vmatprep.subr.mxu0 0.0
        %653 = vmatpush1.msra.mxu0 0.0
        %654 = vmatprep.mubr.f32.mxu0 0.0
        %655 = vmatmul.mubr.f32.gmra.mrb[0].mxu0 %v588
        %v656 = vpop.f32.mrb[0].mxu0
        %v657 = vadd.f32 %v584, %v656
        %v658 = vpop.f32.mrb[0].mxu0
        %659 = vdwg.mxu0
        %vm660 = vcmask 125952
        %661 = vst.msk [vmem:[%s291] sm:$0xf] %vm660, %v657
        %s662 = sand.u32 %s197, 1
        %s663 = scalar_lea.sflag [#allocation4], %s662
        %s664 = sand.u32 %s197, 1
        %s665 = smul.addr %s664, 4
        %s666 = scalar_lea.vmem [#allocation3], %s665
        // Predicated region
        $region49: #{tpu_custom_call.1} parent=47 // pred_check
          %p667 = pneg %p207
        $region50: #{tpu_custom_call.1} parent=47 // pred_check_branch
          %669 = sbr.rel (%p667) target = $region52
        $region51: #{tpu_custom_call.1} parent=47 // pred_region
          %s671 = ssub.s32 64, 64
          %672 = vsyncadd %s663, %s671
          %s673 = sadd.s32 %s26, %s25
          %s674 = smul.addr %s673, 64
          %s675 = scalar_lea.hbm %s7, %s674
          %s677 = sshll.u32 %s666, 4
          %s678 = int_to_ptr.vmem [resolvable:$true] %s677
          %680 = dma.vmem_to_hbm [thread:$0]  %s678, 64, %s675, %s663
        $region52: #{tpu_custom_call.1} parent=47 // pred_fallthru
          _
      $region48: #{tpu_custom_call.1} parent=5 // pred_fallthru
        _
      %p681 = scmp.le.s32.totalorder 2, %s16
      // Predicated region
      $region53: #{tpu_custom_call.1} parent=5 // pred_check
        %p682 = pneg %p681
      $region54: #{tpu_custom_call.1} parent=5 // pred_check_branch
        %684 = sbr.rel (%p682) target = $region56
      $region55: #{tpu_custom_call.1} parent=5 // pred_region
        %s685 = ssub.s32 %s16, 2
        // Predicated region
        $region57: #{tpu_custom_call.1} parent=55 // pred_check
          %p686 = pneg %p213
        $region58: #{tpu_custom_call.1} parent=55 // pred_check_branch
          %688 = sbr.rel (%p686) target = $region60
        $region59: #{tpu_custom_call.1} parent=55 // pred_region
          %s689 = sand.u32 %s198, 1
          %s690 = scalar_lea.sflag [#allocation4], %s689
          %s691 = sand.u32 %s198, 1
          %s692 = smul.addr %s691, 4
          %s693 = scalar_lea.vmem [#allocation3], %s692
          %694 = dma.done %s690, 64
        $region60: #{tpu_custom_call.1} parent=55 // pred_fallthru
          _
      $region56: #{tpu_custom_call.1} parent=5 // pred_fallthru
        _
    $region6: #{tpu_custom_call.1} parent=1 // loop_footer
      %s20 = sadd.s32 1, %s16
    $region7: #{tpu_custom_call.1} parent=1 // loop_footer_branch
      %15 = sbr.rel target = $region3
    $region8: #{tpu_custom_call.1} parent=1 // loop_exit
      _
    %695 = vsyncpa [#allocation4], 1
    %s696 = scalar_lea.sflag [#allocation4], 1
    %697 = vsyncpa %s696, 1

</llo_original>
